<compile_context>
chip_gen: v7x
topology: tpu7x:2x2x1
jax: 0.10.0
libtpu: 0.0.40
codegen_flags: <defaults>
</compile_context>

<pallas_src>
import math

import numpy as np
import jax
import jax.numpy as jnp
from jax import lax
from jax.experimental import pallas as pl
from jax.experimental.pallas import tpu as pltpu


def _round_up(x, m):
    return ((x + m - 1) // m) * m


def _pad2d(a, rows, cols):
    r, c = a.shape
    return jnp.zeros((rows, cols), a.dtype).at[:r, :c].set(a)


# -----------------------------------------------------------------------------
# Pallas kernel 1: char CNN as ONE banded matmul + aligned max-over-time
# -----------------------------------------------------------------------------
def _char_cnn_kernel(x_ref, w_ref, b_ref, out_ref):
    # x_ref: (tn, LC_pad) bf16 ; w_ref: (LC_pad, P*256) bf16 ; b_ref: (1, P*256)
    # out_ref: (tn, 256) f32.  Column block p holds [conv3|conv4|conv5|pad] for
    # time position p; dummy positions / pad lanes have bias -1e9.
    out_w = out_ref.shape[1]
    y = jnp.dot(x_ref[...], w_ref[...],
                preferred_element_type=jnp.float32) + b_ref[...]
    n_pos = y.shape[1] // out_w
    m = y[:, 0:out_w]
    for p in range(1, n_pos):                        # 128-aligned lane slices
        m = jnp.maximum(m, y[:, p * out_w:(p + 1) * out_w])
    out_ref[...] = jnp.maximum(m, 0.0)               # ReLU(max) == max(ReLU)


def char_cnn(x, w3, b3, w4, b4, w5, b5, *, tn=256):
    # x: (N, L, C) float32  ->  (N, 150) float32
    N, L, C = x.shape
    LC = L * C
    LC_pad = _round_up(LC, 128)
    OUTB = 256                                       # lane-dense per-position block
    P = L - 3 + 1                                    # positions of smallest kernel
    W_cols = P * OUTB

    # host-side banded weight: time-shifted filters, one column block per position
    w_big = jnp.zeros((LC_pad, W_cols), jnp.float32)
    b_big = jnp.full((1, W_cols), -1e9, jnp.float32)  # dummy slots never win the max
    for gi, (w, b, ks) in enumerate(((w3, b3, 3), (w4, b4, 4), (w5, b5, 5))):
        wf = w.reshape(ks * C, 50)
        for t in range(L - ks + 1):
            c0 = t * OUTB + gi * 50
            w_big = w_big.at[t * C:(t + ks) * C, c0:c0 + 50].set(wf)
            b_big = b_big.at[0, c0:c0 + 50].set(b.reshape(50))

    n_pad = max(tn, _round_up(N, tn))
    x2d = jnp.zeros((n_pad, LC_pad), jnp.bfloat16)
    x2d = x2d.at[:N, :LC].set(x.reshape(N, LC).astype(jnp.bfloat16))

    out = pl.pallas_call(
        _char_cnn_kernel,
        out_shape=jax.ShapeDtypeStruct((n_pad, OUTB), jnp.float32),
        grid=(n_pad // tn,),
        in_specs=[
            pl.BlockSpec((tn, LC_pad), lambda i: (i, 0)),
            pl.BlockSpec((LC_pad, W_cols), lambda i: (0, 0)),
            pl.BlockSpec((1, W_cols), lambda i: (0, 0)),
        ],
        out_specs=pl.BlockSpec((tn, OUTB), lambda i: (i, 0)),
        compiler_params=pltpu.CompilerParams(
            dimension_semantics=("parallel",)),
    )(x2d, w_big.astype(jnp.bfloat16), b_big)
    return out[:N, :150]


# -----------------------------------------------------------------------------
# Pallas kernel 2: row-tiled 3-layer MLP with ReLU (FFNNMention), padded D/H
# -----------------------------------------------------------------------------
def _mlp3_kernel(x_ref, w0_ref, b0_ref, w1_ref, b1_ref, w2_ref, b2_ref,
                 out_ref):
    h = jnp.dot(x_ref[...], w0_ref[...],
                preferred_element_type=jnp.float32) + b0_ref[...]
    h = jnp.maximum(h, 0.0)
    h = jnp.dot(h.astype(jnp.bfloat16), w1_ref[...],
                preferred_element_type=jnp.float32) + b1_ref[...]
    h = jnp.maximum(h, 0.0)
    o = jnp.sum(h * w2_ref[...], axis=-1, keepdims=True) + b2_ref[...]
    out_ref[...] = jnp.maximum(o, 0.0)   # PyTorch module applies ReLU after layer2


def mlp3(x, params, *, tile_m=256):
    # x: (M, D) -> (M, 1);  dropout layers are identity in eval mode
    M, D = x.shape
    w0, b0, w1, b1, w2, b2 = params
    H = w0.shape[1]
    D_pad = _round_up(D, 128)                        # 1220 -> 1280
    H_pad = _round_up(H, 128)                        # 150  -> 256 (lane-dense)
    m_pad = max(tile_m, _round_up(M, tile_m))

    x_pad = jnp.zeros((m_pad, D_pad), jnp.bfloat16)
    x_pad = x_pad.at[:M, :D].set(x.astype(jnp.bfloat16))
    w0p = _pad2d(w0, D_pad, H_pad).astype(jnp.bfloat16)
    b0p = _pad2d(b0, 1, H_pad)
    w1p = _pad2d(w1, H_pad, H_pad).astype(jnp.bfloat16)
    b1p = _pad2d(b1, 1, H_pad)
    w2p = _pad2d(w2.T, 1, H_pad)

    out = pl.pallas_call(
        _mlp3_kernel,
        out_shape=jax.ShapeDtypeStruct((m_pad, 1), jnp.float32),
        grid=(m_pad // tile_m,),
        in_specs=[
            pl.BlockSpec((tile_m, D_pad), lambda i: (i, 0)),
            pl.BlockSpec((D_pad, H_pad), lambda i: (0, 0)),
            pl.BlockSpec((1, H_pad), lambda i: (0, 0)),
            pl.BlockSpec((H_pad, H_pad), lambda i: (0, 0)),
            pl.BlockSpec((1, H_pad), lambda i: (0, 0)),
            pl.BlockSpec((1, H_pad), lambda i: (0, 0)),
            pl.BlockSpec((1, 1), lambda i: (0, 0)),
        ],
        out_specs=pl.BlockSpec((tile_m, 1), lambda i: (i, 0)),
        compiler_params=pltpu.CompilerParams(
            dimension_semantics=("parallel",)),
    )(x_pad, w0p, b0p, w1p, b1p, w2p, b2)
    return out[:M]


# -----------------------------------------------------------------------------
# Pallas kernel 3: fused FFNNAntecedent scorer (batched Hadamard matmul, halo)
# -----------------------------------------------------------------------------
def _antecedent_kernel(emb_halo_ref, emb_cur_ref, ha_halo_ref, ha_cur_ref,
                       ht_ref, same_ref, offbias_ref, spkdelta_ref,
                       w_p_ref, w1_ref, b1_ref, w2_ref, b2_ref, out_ref):
    T, _ = emb_cur_ref.shape
    halo = emb_halo_ref.shape[0]
    A = out_ref.shape[1]

    curr = emb_cur_ref[...]                                       # (T, D) bf16
    window = jnp.concatenate([emb_halo_ref[...], curr], axis=0)   # (halo+T, D)
    ha_win = jnp.concatenate([ha_halo_ref[...], ha_cur_ref[...]],
                             axis=0)                              # (halo+T, H) f32
    h_t = ht_ref[...]                                             # (T, H) f32
    same = same_ref[...]                                          # (T, A) f32
    spk_delta = spkdelta_ref[...]                                 # (1, H) f32

    # Stack all per-pair Hadamard rows / bias rows -> two big MXU pushes total.
    had_parts = []
    extra_parts = []
    for j in range(1, A + 1):                                     # antecedent offset
        ant = window[halo - j:halo - j + T, :]                    # (T, D) bf16
        had_parts.append(curr * ant)
        extra_parts.append(h_t + ha_win[halo - j:halo - j + T, :]
                           + offbias_ref[j - 1:j, :]              # b0+dist+genre+spk0
                           + same[:, j - 1:j] * spk_delta)        # speaker feature
    had = jnp.concatenate(had_parts, axis=0)                      # (A*T, D) bf16
    extra = jnp.concatenate(extra_parts, axis=0)                  # (A*T, H) f32

    h0 = jnp.dot(had, w_p_ref[...],
                 preferred_element_type=jnp.float32) + extra      # ONE big dot
    h0 = jnp.maximum(h0, 0.0)
    h1 = jnp.dot(h0.astype(jnp.bfloat16), w1_ref[...],
                 preferred_element_type=jnp.float32) + b1_ref[...]
    h1 = jnp.maximum(h1, 0.0)                                     # (A*T, H)

    w2_row = w2_ref[...]
    b2 = b2_ref[...]
    for j in range(1, A + 1):                                     # tiny epilogue
        h1_j = h1[(j - 1) * T:j * T, :]                           # aligned slice
        s = jnp.sum(h1_j * w2_row, axis=-1, keepdims=True) + b2
        out_ref[:, j - 1:j] = jnp.maximum(s, 0.0)  # ReLU after layer2 (module fidelity)


def antecedent_scores_fused(top_span_emb, same_speaker, dist_emb, genre_vec,
                            speaker_table, ffnn_params, *, tile_k=128):
    # top_span_emb: (k, D) f32, same_speaker: (k, A) f32 in {0,1}
    # dist_emb: (A, F), genre_vec: (F,), speaker_table: (2, F)
    w0, b0, w1, b1, w2, b2 = ffnn_params
    k, D = top_span_emb.shape
    A = same_speaker.shape[1]
    H = w0.shape[1]
    F = dist_emb.shape[1]
    D_pad = _round_up(D, 128)                          # 1220 -> 1280
    H_pad = _round_up(H, 128)                          # 150  -> 256
    HALO = 16                                          # bf16-sublane aligned halo
    assert A <= HALO and tile_k % HALO == 0

    # W0 row blocks follow the pair-embedding concat order
    # [target(D), ant(D), target*ant(D), dist(F), speaker(F), genre(F)].
    w_t = w0[0:D]
    w_a = w0[D:2 * D]
    w_p = w0[2 * D:3 * D]
    w_d = w0[3 * D:3 * D + F]
    w_s = w0[3 * D + F:3 * D + 2 * F]
    w_g = w0[3 * D + 2 * F:3 * D + 3 * F]

    dist_contrib = dist_emb @ w_d                      # (A, H)
    genre_contrib = genre_vec @ w_g                    # (H,)
    spk_contrib = speaker_table @ w_s                  # (2, H)
    offset_bias = (b0 + genre_contrib[None, :] + spk_contrib[0][None, :]
                   + dist_contrib)                     # (A, H)
    spk_delta = (spk_contrib[1] - spk_contrib[0])[None, :]

    # Pre-project the target / antecedent slabs ONCE (tiny matmuls in XLA);
    # only the per-pair Hadamard term goes through the Pallas kernel's MXU.
    h_t = top_span_emb @ w_t                           # (k, H)
    h_a = top_span_emb @ w_a                           # (k, H)

    k_pad = max(tile_k, _round_up(k, tile_k))
    # leading tile_k zero rows so curr tiles stay tile-aligned; only the last
    # HALO rows before each tile are re-fetched as the halo block.
    emb_pad = jnp.zeros((tile_k + k_pad, D_pad), jnp.bfloat16)
    emb_pad = emb_pad.at[tile_k:tile_k + k, :D].set(
        top_span_emb.astype(jnp.bfloat16))
    ha_pad = jnp.zeros((tile_k + k_pad, H_pad), jnp.float32)
    ha_pad = ha_pad.at[tile_k:tile_k + k, :H].set(h_a)
    ht_pad = jnp.zeros((k_pad, H_pad), jnp.float32).at[:k, :H].set(h_t)
    same_pad = jnp.zeros((k_pad, A), jnp.float32).at[:k].set(same_speaker)

    offbias_p = _pad2d(offset_bias, A, H_pad)
    spkdelta_p = _pad2d(spk_delta, 1, H_pad)
    w_pp = _pad2d(w_p, D_pad, H_pad).astype(jnp.bfloat16)
    w1p = _pad2d(w1, H_pad, H_pad).astype(jnp.bfloat16)
    b1p = _pad2d(b1, 1, H_pad)
    w2row = _pad2d(w2.T, 1, H_pad)

    halo_blk = tile_k // HALO

    out = pl.pallas_call(
        _antecedent_kernel,
        out_shape=jax.ShapeDtypeStruct((k_pad, A), jnp.float32),
        grid=(k_pad // tile_k,),
        in_specs=[
            # last HALO rows of the previous tile (16-row halo block)
            pl.BlockSpec((HALO, D_pad), lambda i: ((i + 1) * halo_blk - 1, 0)),
            # current span tile (offset by the leading tile_k zero rows)
            pl.BlockSpec((tile_k, D_pad), lambda i: (i + 1, 0)),
            pl.BlockSpec((HALO, H_pad), lambda i: ((i + 1) * halo_blk - 1, 0)),
            pl.BlockSpec((tile_k, H_pad), lambda i: (i + 1, 0)),
            pl.BlockSpec((tile_k, H_pad), lambda i: (i, 0)),       # h_t
            pl.BlockSpec((tile_k, A), lambda i: (i, 0)),           # same-speaker
            pl.BlockSpec((A, H_pad), lambda i: (0, 0)),            # per-offset bias
            pl.BlockSpec((1, H_pad), lambda i: (0, 0)),            # speaker delta
            pl.BlockSpec((D_pad, H_pad), lambda i: (0, 0)),        # W_prod
            pl.BlockSpec((H_pad, H_pad), lambda i: (0, 0)),        # W1
            pl.BlockSpec((1, H_pad), lambda i: (0, 0)),            # b1
            pl.BlockSpec((1, H_pad), lambda i: (0, 0)),            # W2 row
            pl.BlockSpec((1, 1), lambda i: (0, 0)),                # b2
        ],
        out_specs=pl.BlockSpec((tile_k, A), lambda i: (i, 0)),
        compiler_params=pltpu.CompilerParams(
            dimension_semantics=("parallel",),
            vmem_limit_bytes=48 * 1024 * 1024),
    )(emb_pad, emb_pad, ha_pad, ha_pad, ht_pad, same_pad,
      offbias_p, spkdelta_p, w_pp, w1p, b1p, w2row, b2)
    return out[:k]


# -----------------------------------------------------------------------------
# Plain-JAX glue pieces
# -----------------------------------------------------------------------------
def lstm_direction(x_seq, w_ih, w_hh, b_ih, b_hh, h0, c0):
    # x_seq: (T, B, I);  PyTorch gate order i, f, g, o
    x_proj = jnp.einsum("tbi,gi->tbg", x_seq, w_ih) + b_ih + b_hh   # (T, B, 4H)

    def step(carry, xp_t):
        h, c = carry
        gates = xp_t + h @ w_hh.T
        i, f, g, o = jnp.split(gates, 4, axis=-1)
        i = jax.nn.sigmoid(i)
        f = jax.nn.sigmoid(f)
        g = jnp.tanh(g)
        o = jax.nn.sigmoid(o)
        c = f * c + i * g
        h = o * jnp.tanh(c)
        return (h, c), h

    (_, _), hs = lax.scan(step, (h0, c0), x_proj)
    return hs  # (T, B, H)


def bilstm(text_emb, params, hidden_dim):
    # text_emb: (num_sentences, T, I) -> (num_sentences, T, 2*H)
    B, T, _ = text_emb.shape
    x_seq = jnp.transpose(text_emb, (1, 0, 2))   # (T, B, I)
    h0 = jnp.zeros((B, hidden_dim), jnp.float32)
    c0 = jnp.zeros((B, hidden_dim), jnp.float32)
    # TODO(synk): the PyTorch module re-initializes h0/c0 with orthogonal noise
    # each call; zeros are used here for a deterministic eval forward.
    fwd = lstm_direction(x_seq, *params["fwd"], h0, c0)
    bwd = lstm_direction(x_seq[::-1], *params["bwd"], h0, c0)[::-1]
    out = jnp.concatenate([fwd, bwd], axis=-1)   # (T, B, 2H)
    return jnp.transpose(out, (1, 0, 2))


def bucket_values(distances, num_identity_buckets=4, num_total_buckets=10):
    logspace = jnp.floor(
        jnp.log(distances.astype(jnp.float32) + 1e-8) / math.log(2.0)
    ).astype(jnp.int32) + (num_identity_buckets - 1)
    use_identity = (distances < num_identity_buckets).astype(jnp.int32)
    combined = use_identity * distances + (1 - use_identity) * logspace
    return jnp.clip(combined, 0, num_total_buckets - 1)


def generate_valid_antecedents(k, max_antecedents):
    target = jnp.arange(k)[:, None]
    offsets = jnp.arange(1, max_antecedents + 1)[None, :]
    raw = target - offsets                                   # (k, A)
    log_mask = jnp.log((raw >= 0).astype(jnp.float32))       # 0 / -inf
    indices = jnp.maximum(raw, 0).astype(jnp.int32)
    return indices, offsets.astype(jnp.int32), log_mask


# -----------------------------------------------------------------------------
# Parameter construction (deterministic, synthetic)
# -----------------------------------------------------------------------------
def init_params(key):
    counter = [0]

    def nrm(shape, scale=0.05):
        counter[0] += 1
        k = jax.random.fold_in(key, counter[0])
        return (scale * jax.random.normal(k, shape)).astype(jnp.float32)

    p = {}
    p["char_emb"] = nrm((115, 8), 0.1)
    p["cnn"] = dict(
        w3=nrm((3, 8, 50)), b3=nrm((1, 50)),
        w4=nrm((4, 8, 50)), b4=nrm((1, 50)),
        w5=nrm((5, 8, 50)), b5=nrm((1, 50)),
    )
    I, H = 500, 200
    p["lstm"] = dict(
        fwd=(nrm((4 * H, I)), nrm((4 * H, H)),
             nrm((4 * H,)), nrm((4 * H,))),
        bwd=(nrm((4 * H, I)), nrm((4 * H, H)),
             nrm((4 * H,)), nrm((4 * H,))),
    )
    p["width_emb"] = nrm((10, 20), 0.1)
    p["att_w"] = nrm((400, 1))
    p["att_b"] = nrm((1,))
    p["ffnn_mention"] = (nrm((1220, 150)), nrm((1, 150)),
                         nrm((150, 150)), nrm((1, 150)),
                         nrm((150, 1)), nrm((1, 1)))
    p["ffnn_antecedent"] = (nrm((3720, 150)), nrm((1, 150)),
                            nrm((150, 150)), nrm((1, 150)),
                            nrm((150, 1)), nrm((1, 1)))
    p["genre_emb"] = nrm((7, 20), 0.1)
    p["same_speaker_emb"] = nrm((2, 20), 0.1)
    p["mention_distance_emb"] = nrm((10, 20), 0.1)
    return p


# -----------------------------------------------------------------------------
# CorefModel forward (eval mode)
# -----------------------------------------------------------------------------
CONFIG = dict(
    feature_size=20,
    max_mention_width=3,
    mention_ratio=0.4,
    max_antecedents=10,
    char_embedding_size=8,
)


def coref_forward(params, word_emb, char_index, text_len, speaker_ids, genre):
    num_sentences, max_sentence_length, _ = word_emb.shape
    total = num_sentences * max_sentence_length

    # --- char embeddings + char CNN (Pallas) -------------------------------
    char_emb = params["char_emb"][char_index]                 # (S, T, L, 8)
    flat_char = char_emb.reshape(total, char_index.shape[2], 8)
    c = params["cnn"]
    agg_char = char_cnn(flat_char, c["w3"], c["b3"], c["w4"], c["b4"],
                        c["w5"], c["b5"])                     # (total, 150)
    agg_char = agg_char.reshape(num_sentences, max_sentence_length, 150)

    text_emb = jnp.concatenate([word_emb, agg_char], axis=2)  # (S, T, 500)
    # lexical_dropout: identity in eval

    # --- BiLSTM encoder (plain JAX scan, input projection hoisted) ---------
    # TODO(synk): text_len masking / flatten_emb_by_sentence is data-dependent
    # shape selection; demo uses full-length sentences so flatten == reshape.
    text_outputs = bilstm(text_emb, params["lstm"], 200)      # (S, T, 400)
    text_outputs = text_outputs.reshape(total, 400)
    # dropout: identity in eval

    # --- candidate span enumeration (static) --------------------------------
    starts_l, ends_l = [], []
    for s in range(num_sentences):
        off = s * max_sentence_length
        for i in range(max_sentence_length):
            for w in range(1, CONFIG["max_mention_width"] + 1):
                j = i + w - 1
                if j < max_sentence_length:
                    starts_l.append(off + i)
                    ends_l.append(off + j)
    cand_starts = jnp.asarray(starts_l, jnp.int32)
    cand_ends = jnp.asarray(ends_l, jnp.int32)
    spans = jnp.stack([cand_starts, cand_ends], axis=1)       # (Ncand, 2)

    # --- endpoint span extractor (x,y + width embedding) --------------------
    widths = jnp.clip(cand_ends - cand_starts, 0, 9)
    endpoint_emb = jnp.concatenate(
        [text_outputs[cand_starts], text_outputs[cand_ends],
         params["width_emb"][widths]], axis=-1)               # (Ncand, 820)

    # --- self-attentive span extractor ---------------------------------------
    att_logits = (text_outputs @ params["att_w"] + params["att_b"])[:, 0]
    Wm = CONFIG["max_mention_width"]
    pos = cand_starts[:, None] + jnp.arange(Wm)[None, :]
    valid = pos <= cand_ends[:, None]
    pos_c = jnp.minimum(pos, cand_ends[:, None])
    span_tok_emb = text_outputs[pos_c]                        # (Ncand, Wm, 400)
    span_logits = jnp.where(valid, att_logits[pos_c], -1e30)
    att_w = jax.nn.softmax(span_logits, axis=-1)
    attended = jnp.sum(att_w[..., None] * span_tok_emb, axis=1)  # (Ncand, 400)

    span_embeddings = jnp.concatenate([endpoint_emb, attended], axis=-1)  # 1220

    # --- mention scoring (Pallas FFNNMention) + span pruning ----------------
    mention_scores = mlp3(span_embeddings, params["ffnn_mention"])  # (Ncand,1)
    k = int(np.floor(float(total) * CONFIG["mention_ratio"]))
    _, top_idx = lax.top_k(mention_scores[:, 0], k)
    top_idx = jnp.sort(top_idx)                               # document order
    top_span_embeddings = span_embeddings[top_idx]            # (k, 1220)
    top_span_mention_scores = mention_scores[top_idx]         # (k, 1)
    top_spans = spans[top_idx]                                # (k, 2)

    # --- antecedent candidates ------------------------------------------------
    max_ant = min(k, CONFIG["max_antecedents"])
    ant_indices, ant_offsets, ant_log_mask = generate_valid_antecedents(
        k, max_ant)
    cand_ant_scores = top_span_mention_scores[ant_indices, 0]  # (k, A)

    # --- pair features (built on-chip by the fused kernel) -------------------
    mention_speaker = speaker_ids[top_spans[:, 0]]             # (k,)
    ant_speaker = mention_speaker[ant_indices]                 # (k, A)
    same_speaker = (mention_speaker[:, None] == ant_speaker).astype(jnp.float32)
    dist_emb_rows = params["mention_distance_emb"][
        bucket_values(ant_offsets)[0]]                         # (A, 20)

    # --- antecedent scoring (fused Pallas FFNNAntecedent) ---------------------
    raw_ant_scores = antecedent_scores_fused(
        top_span_embeddings, same_speaker, dist_emb_rows,
        params["genre_emb"][genre], params["same_speaker_emb"],
        params["ffnn_antecedent"])                             # (k, A)

    ant_scores = (raw_ant_scores + top_span_mention_scores
                  + cand_ant_scores + ant_log_mask)
    dummy = jnp.zeros((k, 1), jnp.float32)
    coreference_scores = jnp.concatenate([dummy, ant_scores], axis=-1)

    predicted_antecedents = jnp.argmax(coreference_scores, axis=1) - 1

    # TODO(synk): loss path (gold span labels, log-softmax marginal likelihood)
    # and CoNLL/MentionRecall metrics are omitted (external metric classes,
    # data-dependent python loops).
    return {
        "top_spans": top_spans,
        "antecedent_indices": ant_indices,
        "predicted_antecedents": predicted_antecedents,
        "coreference_scores": coreference_scores,
    }


# -----------------------------------------------------------------------------
if __name__ == "__main__":
    key = jax.random.PRNGKey(0)
    pkey, dkey = jax.random.split(key)
    params = init_params(pkey)

    num_sentences = 2
    max_sentence_length = 8
    max_chars = 8
    word_dim = 350          # embedding_size (bilstm input 500 = 350 + 150 char)

    k1, k2, k3 = jax.random.split(dkey, 3)
    word_emb = (0.1 * jax.random.normal(
        k1, (num_sentences, max_sentence_length, word_dim))).astype(jnp.float32)
    char_index = jax.random.randint(
        k2, (num_sentences, max_sentence_length, max_chars), 0, 115,
        dtype=jnp.int32)
    text_len = jnp.full((num_sentences,), max_sentence_length, jnp.int32)
    speaker_ids = jax.random.randint(
        k3, (num_sentences * max_sentence_length,), 0, 3, dtype=jnp.int32)
    genre = 3

    out = coref_forward(params, word_emb, char_index, text_len,
                        speaker_ids, genre)
    jax.block_until_ready(out["coreference_scores"])
    jax.block_until_ready(out["predicted_antecedents"])
    print("KERNEL_OK")
</pallas_src>

<mosaic_0001>
module attributes {stable_mosaic.version = 11 : i64} {
  func.func @_char_cnn_kernel(%arg0: i32, %arg1: memref<256x128xbf16, #tpu.memory_space<vmem>>, %arg2: memref<128x1536xbf16, #tpu.memory_space<vmem>>, %arg3: memref<1x1536xf32, #tpu.memory_space<vmem>>, %arg4: memref<256x256xf32, #tpu.memory_space<vmem>>) attributes {dimension_semantics = [#tpu.dimension_semantics<parallel>], iteration_bounds = array<i64: 1>, scalar_prefetch = 0 : i64, scratch_operands = 0 : i64, tpu.core_type = #tpu.core_type<tc>, window_params = [{transform_indices = @transform_0, window_bounds = array<i64: 256, 128>}, {pipeline_mode = #tpu.pipeline_mode<synchronous>, transform_indices = @transform_1, window_bounds = array<i64: 128, 1536>}, {pipeline_mode = #tpu.pipeline_mode<synchronous>, transform_indices = @transform_2, window_bounds = array<i64: 1, 1536>}, {transform_indices = @transform_3, window_bounds = array<i64: 256, 256>}]} {
    %c0 = arith.constant 0 : index
    %c0_0 = arith.constant 0 : index
    %0 = vector.load %arg1[%c0, %c0_0] : memref<256x128xbf16, #tpu.memory_space<vmem>>, vector<256x128xbf16>
    %c0_1 = arith.constant 0 : index
    %c0_2 = arith.constant 0 : index
    %1 = vector.load %arg2[%c0_1, %c0_2] : memref<128x1536xbf16, #tpu.memory_space<vmem>>, vector<128x1536xbf16>
    %cst = arith.constant dense<0.000000e+00> : vector<256x1536xf32>
    %2 = tpu.matmul %0, %1, %cst {dimension_numbers = #tpu.dot_dimension_numbers<[1], [0], [0], [1], [0, 0, 1, 1], [], []>} : vector<256x128xbf16>, vector<128x1536xbf16>, vector<256x1536xf32> -> vector<256x1536xf32>
    %c0_3 = arith.constant 0 : index
    %c0_4 = arith.constant 0 : index
    %3 = vector.load %arg3[%c0_3, %c0_4] : memref<1x1536xf32, #tpu.memory_space<vmem>>, vector<1x1536xf32>
    %4 = vector.broadcast %3 : vector<1x1536xf32> to vector<256x1536xf32>
    %5 = arith.addf %2, %4 : vector<256x1536xf32>
    %6 = vector.extract_strided_slice %5 {offsets = [0, 0], sizes = [256, 256], strides = [1, 1]} : vector<256x1536xf32> to vector<256x256xf32>
    %7 = vector.extract_strided_slice %5 {offsets = [0, 256], sizes = [256, 256], strides = [1, 1]} : vector<256x1536xf32> to vector<256x256xf32>
    %8 = arith.maximumf %6, %7 : vector<256x256xf32>
    %9 = vector.extract_strided_slice %5 {offsets = [0, 512], sizes = [256, 256], strides = [1, 1]} : vector<256x1536xf32> to vector<256x256xf32>
    %10 = arith.maximumf %8, %9 : vector<256x256xf32>
    %11 = vector.extract_strided_slice %5 {offsets = [0, 768], sizes = [256, 256], strides = [1, 1]} : vector<256x1536xf32> to vector<256x256xf32>
    %12 = arith.maximumf %10, %11 : vector<256x256xf32>
    %13 = vector.extract_strided_slice %5 {offsets = [0, 1024], sizes = [256, 256], strides = [1, 1]} : vector<256x1536xf32> to vector<256x256xf32>
    %14 = arith.maximumf %12, %13 : vector<256x256xf32>
    %15 = vector.extract_strided_slice %5 {offsets = [0, 1280], sizes = [256, 256], strides = [1, 1]} : vector<256x1536xf32> to vector<256x256xf32>
    %16 = arith.maximumf %14, %15 : vector<256x256xf32>
    %cst_5 = arith.constant 0.000000e+00 : f32
    %17 = vector.broadcast %cst_5 : f32 to vector<256x256xf32>
    %18 = arith.maximumf %16, %17 : vector<256x256xf32>
    %c0_6 = arith.constant 0 : index
    %c0_7 = arith.constant 0 : index
    %19 = vector.load %arg4[%c0_6, %c0_7] : memref<256x256xf32, #tpu.memory_space<vmem>>, vector<256x256xf32>
    tpu.vector_store %arg4[%c0_6, %c0_7], %18 {strides = array<i32>} : memref<256x256xf32, #tpu.memory_space<vmem>>, vector<256x256xf32>,
    return
  }
  func.func @transform_0(%arg0: i32) -> (i32, i32) {
    %c0_i32 = arith.constant 0 : i32
    %c0_i32_0 = arith.constant 0 : i32
    return %arg0, %c0_i32 : i32, i32
  }
  func.func @transform_1(%arg0: i32) -> (i32, i32) {
    %c0_i32 = arith.constant 0 : i32
    %c0_i32_0 = arith.constant 0 : i32
    %c0_i32_1 = arith.constant 0 : i32
    return %c0_i32, %c0_i32_0 : i32, i32
  }
  func.func @transform_2(%arg0: i32) -> (i32, i32) {
    %c0_i32 = arith.constant 0 : i32
    %c0_i32_0 = arith.constant 0 : i32
    %c0_i32_1 = arith.constant 0 : i32
    return %c0_i32, %c0_i32_0 : i32, i32
  }
  func.func @transform_3(%arg0: i32) -> (i32, i32) {
    %c0_i32 = arith.constant 0 : i32
    %c0_i32_0 = arith.constant 0 : i32
    return %arg0, %c0_i32 : i32, i32
  }
}

</mosaic_0001>

<llo_original>
// kernel: tpu_custom_call.1
$region0: #{tpu_custom_call.1}
  #allocation0 [shape = 'u32[]', space=smem, size = 0x4, offset = 0x4, fixed_abs, tag = 'smem constant byte address 0x4 - core index']
  #allocation1 [shape = 'u32[144,128]{1,0:T(1,128)}', space=vmem, size = 0x12000, scoped, tag = 'internal scratch']
  %s0 = inlined_call_operand.hbm [shape: bf16[256,128], index: 0, kind: input, shape index: {}]
  %s1 = inlined_call_operand.hbm [shape: bf16[128,1536], index: 1, kind: input, shape index: {}]
  %s2 = inlined_call_operand.hbm [shape: f32[1,1536], index: 2, kind: input, shape index: {}]
  %s3 = inlined_call_operand.hbm [shape: f32[256,256], index: 3, kind: output, shape index: {}]
  %s4 = sld [smem:[#allocation0]]
  $region34: #{tpu_custom_call.1} parent=0
    _
  %s6 = ssub.s32 1, %s4
  %s7 = scalar_select 0, %s6, %s4
  $region1: #{tpu_custom_call.1} parent=0
    #allocation2 [shape = 'u8[65536]{0}', space=vmem, size = 0x10000, scoped, tag = 'input window, operand 0, single buffered']
    #allocation3 [shape = 's32[1]{0}', space=sflag, size = 0x4, scoped, tag = 'scoped memory for tpu_custom_call.1']
    #allocation4 [shape = 's32[1]{0}', space=sflag, size = 0x4, scoped, tag = 'scoped memory for tpu_custom_call.1']
    #allocation5 [shape = 'u8[393216]{0}', space=vmem, size = 0x60000, scoped, tag = 'input window, operand 1, single buffered']
    #allocation6 [shape = 's32[1]{0}', space=sflag, size = 0x4, scoped, tag = 'scoped memory for tpu_custom_call.1']
    #allocation7 [shape = 'u8[6144]{0}', space=vmem, size = 0x1800, scoped, tag = 'input window, operand 2, single buffered']
    #allocation8 [shape = 'u8[262144]{0}', space=vmem, size = 0x40000, scoped, tag = 'output window, operand 0, single buffered']
    %8 = vsyncpa [#allocation3], 0
    %9 = vsyncpa [#allocation6], 0
    %10 = vsyncpa [#allocation4], 0
    // Predicated region
    $region2: #{tpu_custom_call.1} parent=1 // pred_check
      _
    $region3: #{tpu_custom_call.1} parent=1 // pred_check_branch
      %12 = sbr.rel (0) target = $region5
    $region4: #{tpu_custom_call.1} parent=1 // pred_region
      %s14 = ssub.s32 2048, 2048
      %15 = vsyncadd [#allocation3], %s14
      %s16 = sshll.u32 [#allocation2], 4
      %s17 = int_to_ptr.vmem [resolvable:$true] %s16
      %22 = dma.hbm_to_vmem [thread:$0]  %s0, 2048, %s17, [#allocation3], 64, 64, 4
    $region5: #{tpu_custom_call.1} parent=1 // pred_fallthru
      _
    // Predicated region
    $region6: #{tpu_custom_call.1} parent=1 // pred_check
      _
    $region7: #{tpu_custom_call.1} parent=1 // pred_check_branch
      %24 = sbr.rel (0) target = $region9
    $region8: #{tpu_custom_call.1} parent=1 // pred_region
      %s26 = ssub.s32 12288, 12288
      %27 = vsyncadd [#allocation6], %s26
      %s28 = sshll.u32 [#allocation5], 4
      %s29 = int_to_ptr.vmem [resolvable:$true] %s28
      %34 = dma.hbm_to_vmem [thread:$0]  %s1, 12288, %s29, [#allocation6], 768, 768, 48
    $region9: #{tpu_custom_call.1} parent=1 // pred_fallthru
      _
    // Predicated region
    $region10: #{tpu_custom_call.1} parent=1 // pred_check
      _
    $region11: #{tpu_custom_call.1} parent=1 // pred_check_branch
      %36 = sbr.rel (0) target = $region13
    $region12: #{tpu_custom_call.1} parent=1 // pred_region
      %s38 = ssub.s32 192, 192
      %39 = vsyncadd [#allocation6], %s38
      %s41 = sshll.u32 [#allocation7], 4
      %s42 = int_to_ptr.vmem [resolvable:$true] %s41
      %44 = dma.hbm_to_vmem [thread:$0]  %s2, 192, %s42, [#allocation6]
    $region13: #{tpu_custom_call.1} parent=1 // pred_fallthru
      _
    // Predicated region
    $region14: #{tpu_custom_call.1} parent=1 // pred_check
      _
    $region15: #{tpu_custom_call.1} parent=1 // pred_check_branch
      %46 = sbr.rel (0) target = $region17
    $region16: #{tpu_custom_call.1} parent=1 // pred_region
      %47 = dma.done [#allocation3], 2048
    $region17: #{tpu_custom_call.1} parent=1 // pred_fallthru
      _
    // Predicated region
    $region18: #{tpu_custom_call.1} parent=1 // pred_check
      _
    $region19: #{tpu_custom_call.1} parent=1 // pred_check_branch
      %49 = sbr.rel (0) target = $region21
    $region20: #{tpu_custom_call.1} parent=1 // pred_region
      %50 = dma.done [#allocation6], 12288
    $region21: #{tpu_custom_call.1} parent=1 // pred_fallthru
      _
    // Predicated region
    $region22: #{tpu_custom_call.1} parent=1 // pred_check
      _
    $region23: #{tpu_custom_call.1} parent=1 // pred_check_branch
      %52 = sbr.rel (0) target = $region25
    $region24: #{tpu_custom_call.1} parent=1 // pred_region
      %53 = dma.done [#allocation6], 192
    $region25: #{tpu_custom_call.1} parent=1 // pred_fallthru
      _
    %v55 = vld [vmem:[#allocation2] sm:$0xf]
    %v56 = vld [vmem:[#allocation2 + $0x4] sm:$0xf]
    %v57 = vld [vmem:[#allocation2 + $0x8] sm:$0xf]
    %v58 = vld [vmem:[#allocation2 + $0xc] sm:$0xf]
    %v59 = vld [vmem:[#allocation2 + $0x10] sm:$0xf]
    %v60 = vld [vmem:[#allocation2 + $0x14] sm:$0xf]
    %v61 = vld [vmem:[#allocation2 + $0x18] sm:$0xf]
    %v62 = vld [vmem:[#allocation2 + $0x1c] sm:$0xf]
    %v63 = vld [vmem:[#allocation2 + $0x20] sm:$0xf]
    %v64 = vld [vmem:[#allocation2 + $0x24] sm:$0xf]
    %v65 = vld [vmem:[#allocation2 + $0x28] sm:$0xf]
    %v66 = vld [vmem:[#allocation2 + $0x2c] sm:$0xf]
    %v67 = vld [vmem:[#allocation2 + $0x30] sm:$0xf]
    %v68 = vld [vmem:[#allocation2 + $0x34] sm:$0xf]
    %v69 = vld [vmem:[#allocation2 + $0x38] sm:$0xf]
    %v70 = vld [vmem:[#allocation2 + $0x3c] sm:$0xf]
    %v71 = vld [vmem:[#allocation2 + $0x40] sm:$0xf]
    %v72 = vld [vmem:[#allocation2 + $0x44] sm:$0xf]
    %v73 = vld [vmem:[#allocation2 + $0x48] sm:$0xf]
    %v74 = vld [vmem:[#allocation2 + $0x4c] sm:$0xf]
    %v75 = vld [vmem:[#allocation2 + $0x50] sm:$0xf]
    %v76 = vld [vmem:[#allocation2 + $0x54] sm:$0xf]
    %v77 = vld [vmem:[#allocation2 + $0x58] sm:$0xf]
    %v78 = vld [vmem:[#allocation2 + $0x5c] sm:$0xf]
    %v79 = vld [vmem:[#allocation2 + $0x60] sm:$0xf]
    %v80 = vld [vmem:[#allocation2 + $0x64] sm:$0xf]
    %v81 = vld [vmem:[#allocation2 + $0x68] sm:$0xf]
    %v82 = vld [vmem:[#allocation2 + $0x6c] sm:$0xf]
    %v83 = vld [vmem:[#allocation2 + $0x70] sm:$0xf]
    %v84 = vld [vmem:[#allocation2 + $0x74] sm:$0xf]
    %v85 = vld [vmem:[#allocation2 + $0x78] sm:$0xf]
    %v86 = vld [vmem:[#allocation2 + $0x7c] sm:$0xf]
    %v87 = vld [vmem:[#allocation5] sm:$0xff]
    %v88 = vld [vmem:[#allocation5 + $0x8] sm:$0xff]
    %v89 = vld [vmem:[#allocation5 + $0x10] sm:$0xff]
    %v90 = vld [vmem:[#allocation5 + $0x18] sm:$0xff]
    %v91 = vld [vmem:[#allocation5 + $0x20] sm:$0xff]
    %v92 = vld [vmem:[#allocation5 + $0x28] sm:$0xff]
    %v93 = vld [vmem:[#allocation5 + $0x30] sm:$0xff]
    %v94 = vld [vmem:[#allocation5 + $0x38] sm:$0xff]
    %v95 = vld [vmem:[#allocation5 + $0x40] sm:$0xff]
    %v96 = vld [vmem:[#allocation5 + $0x48] sm:$0xff]
    %v97 = vld [vmem:[#allocation5 + $0x50] sm:$0xff]
    %v98 = vld [vmem:[#allocation5 + $0x58] sm:$0xff]
    %v99 = vld [vmem:[#allocation5 + $0x60] sm:$0xff]
    %v100 = vld [vmem:[#allocation5 + $0x68] sm:$0xff]
    %v101 = vld [vmem:[#allocation5 + $0x70] sm:$0xff]
    %v102 = vld [vmem:[#allocation5 + $0x78] sm:$0xff]
    %v103 = vld [vmem:[#allocation5 + $0x80] sm:$0xff]
    %v104 = vld [vmem:[#allocation5 + $0x88] sm:$0xff]
    %v105 = vld [vmem:[#allocation5 + $0x90] sm:$0xff]
    %v106 = vld [vmem:[#allocation5 + $0x98] sm:$0xff]
    %v107 = vld [vmem:[#allocation5 + $0xa0] sm:$0xff]
    %v108 = vld [vmem:[#allocation5 + $0xa8] sm:$0xff]
    %v109 = vld [vmem:[#allocation5 + $0xb0] sm:$0xff]
    %v110 = vld [vmem:[#allocation5 + $0xb8] sm:$0xff]
    %v111 = vld [vmem:[#allocation5 + $0xc0] sm:$0xff]
    %v112 = vld [vmem:[#allocation5 + $0xc8] sm:$0xff]
    %v113 = vld [vmem:[#allocation5 + $0xd0] sm:$0xff]
    %v114 = vld [vmem:[#allocation5 + $0xd8] sm:$0xff]
    %v115 = vld [vmem:[#allocation5 + $0xe0] sm:$0xff]
    %v116 = vld [vmem:[#allocation5 + $0xe8] sm:$0xff]
    %v117 = vld [vmem:[#allocation5 + $0xf0] sm:$0xff]
    %v118 = vld [vmem:[#allocation5 + $0xf8] sm:$0xff]
    %v119 = vld [vmem:[#allocation5 + $0x100] sm:$0xff]
    %v120 = vld [vmem:[#allocation5 + $0x108] sm:$0xff]
    %v121 = vld [vmem:[#allocation5 + $0x110] sm:$0xff]
    %v122 = vld [vmem:[#allocation5 + $0x118] sm:$0xff]
    %v123 = vld [vmem:[#allocation5 + $0x120] sm:$0xff]
    %v124 = vld [vmem:[#allocation5 + $0x128] sm:$0xff]
    %v125 = vld [vmem:[#allocation5 + $0x130] sm:$0xff]
    %v126 = vld [vmem:[#allocation5 + $0x138] sm:$0xff]
    %v127 = vld [vmem:[#allocation5 + $0x140] sm:$0xff]
    %v128 = vld [vmem:[#allocation5 + $0x148] sm:$0xff]
    %v129 = vld [vmem:[#allocation5 + $0x150] sm:$0xff]
    %v130 = vld [vmem:[#allocation5 + $0x158] sm:$0xff]
    %v131 = vld [vmem:[#allocation5 + $0x160] sm:$0xff]
    %v132 = vld [vmem:[#allocation5 + $0x168] sm:$0xff]
    %v133 = vld [vmem:[#allocation5 + $0x170] sm:$0xff]
    %v134 = vld [vmem:[#allocation5 + $0x178] sm:$0xff]
    %v135 = vld [vmem:[#allocation5 + $0x180] sm:$0xff]
    %v136 = vld [vmem:[#allocation5 + $0x188] sm:$0xff]
    %v137 = vld [vmem:[#allocation5 + $0x190] sm:$0xff]
    %v138 = vld [vmem:[#allocation5 + $0x198] sm:$0xff]
    %v139 = vld [vmem:[#allocation5 + $0x1a0] sm:$0xff]
    %v140 = vld [vmem:[#allocation5 + $0x1a8] sm:$0xff]
    %v141 = vld [vmem:[#allocation5 + $0x1b0] sm:$0xff]
    %v142 = vld [vmem:[#allocation5 + $0x1b8] sm:$0xff]
    %v143 = vld [vmem:[#allocation5 + $0x1c0] sm:$0xff]
    %v144 = vld [vmem:[#allocation5 + $0x1c8] sm:$0xff]
    %v145 = vld [vmem:[#allocation5 + $0x1d0] sm:$0xff]
    %v146 = vld [vmem:[#allocation5 + $0x1d8] sm:$0xff]
    %v147 = vld [vmem:[#allocation5 + $0x1e0] sm:$0xff]
    %v148 = vld [vmem:[#allocation5 + $0x1e8] sm:$0xff]
    %v149 = vld [vmem:[#allocation5 + $0x1f0] sm:$0xff]
    %v150 = vld [vmem:[#allocation5 + $0x1f8] sm:$0xff]
    %v151 = vld [vmem:[#allocation5 + $0x200] sm:$0xff]
    %v152 = vld [vmem:[#allocation5 + $0x208] sm:$0xff]
    %v153 = vld [vmem:[#allocation5 + $0x210] sm:$0xff]
    %v154 = vld [vmem:[#allocation5 + $0x218] sm:$0xff]
    %v155 = vld [vmem:[#allocation5 + $0x220] sm:$0xff]
    %v156 = vld [vmem:[#allocation5 + $0x228] sm:$0xff]
    %v157 = vld [vmem:[#allocation5 + $0x230] sm:$0xff]
    %v158 = vld [vmem:[#allocation5 + $0x238] sm:$0xff]
    %v159 = vld [vmem:[#allocation5 + $0x240] sm:$0xff]
    %v160 = vld [vmem:[#allocation5 + $0x248] sm:$0xff]
    %v161 = vld [vmem:[#allocation5 + $0x250] sm:$0xff]
    %v162 = vld [vmem:[#allocation5 + $0x258] sm:$0xff]
    %v163 = vld [vmem:[#allocation5 + $0x260] sm:$0xff]
    %v164 = vld [vmem:[#allocation5 + $0x268] sm:$0xff]
    %v165 = vld [vmem:[#allocation5 + $0x270] sm:$0xff]
    %v166 = vld [vmem:[#allocation5 + $0x278] sm:$0xff]
    %v167 = vld [vmem:[#allocation5 + $0x280] sm:$0xff]
    %v168 = vld [vmem:[#allocation5 + $0x288] sm:$0xff]
    %v169 = vld [vmem:[#allocation5 + $0x290] sm:$0xff]
    %v170 = vld [vmem:[#allocation5 + $0x298] sm:$0xff]
    %v171 = vld [vmem:[#allocation5 + $0x2a0] sm:$0xff]
    %v172 = vld [vmem:[#allocation5 + $0x2a8] sm:$0xff]
    %v173 = vld [vmem:[#allocation5 + $0x2b0] sm:$0xff]
    %v174 = vld [vmem:[#allocation5 + $0x2b8] sm:$0xff]
    %v175 = vld [vmem:[#allocation5 + $0x2c0] sm:$0xff]
    %v176 = vld [vmem:[#allocation5 + $0x2c8] sm:$0xff]
    %v177 = vld [vmem:[#allocation5 + $0x2d0] sm:$0xff]
    %v178 = vld [vmem:[#allocation5 + $0x2d8] sm:$0xff]
    %v179 = vld [vmem:[#allocation5 + $0x2e0] sm:$0xff]
    %v180 = vld [vmem:[#allocation5 + $0x2e8] sm:$0xff]
    %v181 = vld [vmem:[#allocation5 + $0x2f0] sm:$0xff]
    %v182 = vld [vmem:[#allocation5 + $0x2f8] sm:$0xff]
    %v183 = vld [vmem:[#allocation7] sm:$0xff]
    %v184 = vld [vmem:[#allocation7 + $0x8] sm:$0xf]
    %v187 = vlaneseq
    %v188 = vshrl.u32 %v187, 7
    %v189 = vsub.s32 0, %v188
    %v190 = vrot.slane %v183, %v189
    %v191 = vlaneseq
    %v192 = vshrl.u32 %v191, 7
    %v193 = vsub.s32 1, %v192
    %v194 = vrot.slane %v183, %v193
    %v195 = vlaneseq
    %v196 = vshrl.u32 %v195, 7
    %v197 = vsub.s32 2, %v196
    %v198 = vrot.slane %v183, %v197
    %v199 = vlaneseq
    %v200 = vshrl.u32 %v199, 7
    %v201 = vsub.s32 3, %v200
    %v202 = vrot.slane %v183, %v201
    %v203 = vlaneseq
    %v204 = vshrl.u32 %v203, 7
    %v205 = vsub.s32 4, %v204
    %v206 = vrot.slane %v183, %v205
    %v207 = vlaneseq
    %v208 = vshrl.u32 %v207, 7
    %v209 = vsub.s32 5, %v208
    %v210 = vrot.slane %v183, %v209
    %v211 = vlaneseq
    %v212 = vshrl.u32 %v211, 7
    %v213 = vsub.s32 6, %v212
    %v214 = vrot.slane %v183, %v213
    %v215 = vlaneseq
    %v216 = vshrl.u32 %v215, 7
    %v217 = vsub.s32 7, %v216
    %v218 = vrot.slane %v183, %v217
    %v219 = vlaneseq
    %v220 = vshrl.u32 %v219, 7
    %v221 = vsub.s32 0, %v220
    %v222 = vrot.slane %v184, %v221
    %v223 = vlaneseq
    %v224 = vshrl.u32 %v223, 7
    %v225 = vsub.s32 1, %v224
    %v226 = vrot.slane %v184, %v225
    %v227 = vlaneseq
    %v228 = vshrl.u32 %v227, 7
    %v229 = vsub.s32 2, %v228
    %v230 = vrot.slane %v184, %v229
    %v231 = vlaneseq
    %v232 = vshrl.u32 %v231, 7
    %v233 = vsub.s32 3, %v232
    %v234 = vrot.slane %v184, %v233
    %v279 = vunpack.c.l.b16 %v55
    %v280 = vunpack.c.l.b16 %v56
    %v281 = vunpack.c.l.b16 %v57
    %v282 = vunpack.c.l.b16 %v58
    %v283 = vunpack.c.l.b16 %v59
    %v284 = vunpack.c.l.b16 %v60
    %v285 = vunpack.c.l.b16 %v61
    %v286 = vunpack.c.l.b16 %v62
    %v287 = vunpack.c.l.b16 %v63
    %v288 = vunpack.c.l.b16 %v64
    %v289 = vunpack.c.l.b16 %v65
    %v290 = vunpack.c.l.b16 %v66
    %v291 = vunpack.c.l.b16 %v67
    %v292 = vunpack.c.l.b16 %v68
    %v293 = vunpack.c.l.b16 %v69
    %v294 = vunpack.c.l.b16 %v70
    %v295 = vunpack.c.l.b16 %v71
    %v296 = vunpack.c.l.b16 %v72
    %v297 = vunpack.c.l.b16 %v73
    %v298 = vunpack.c.l.b16 %v74
    %v299 = vunpack.c.l.b16 %v75
    %v300 = vunpack.c.l.b16 %v76
    %v301 = vunpack.c.l.b16 %v77
    %v302 = vunpack.c.l.b16 %v78
    %v303 = vunpack.c.l.b16 %v79
    %v304 = vunpack.c.l.b16 %v80
    %v305 = vunpack.c.l.b16 %v81
    %v306 = vunpack.c.l.b16 %v82
    %v307 = vunpack.c.l.b16 %v83
    %v308 = vunpack.c.l.b16 %v84
    %v309 = vunpack.c.l.b16 %v85
    %v310 = vunpack.c.l.b16 %v86
    %v311 = vpack.c.b16 %v280, %v279
    %v312 = vpack.c.b16 %v282, %v281
    %v313 = vpack.c.b16 %v284, %v283
    %v314 = vpack.c.b16 %v286, %v285
    %v315 = vpack.c.b16 %v288, %v287
    %v316 = vpack.c.b16 %v290, %v289
    %v317 = vpack.c.b16 %v292, %v291
    %v318 = vpack.c.b16 %v294, %v293
    %v319 = vpack.c.b16 %v296, %v295
    %v320 = vpack.c.b16 %v298, %v297
    %v321 = vpack.c.b16 %v300, %v299
    %v322 = vpack.c.b16 %v302, %v301
    %v323 = vpack.c.b16 %v304, %v303
    %v324 = vpack.c.b16 %v306, %v305
    %v325 = vpack.c.b16 %v308, %v307
    %v326 = vpack.c.b16 %v310, %v309
    %v439 = vunpack.c.l.b16 %v87
    %v440 = vunpack.c.h.b16 %v87
    %v441 = vunpack.c.l.b16 %v88
    %v442 = vunpack.c.h.b16 %v88
    %v443 = vunpack.c.l.b16 %v89
    %v444 = vunpack.c.h.b16 %v89
    %v445 = vunpack.c.l.b16 %v90
    %v446 = vunpack.c.h.b16 %v90
    %v447 = vunpack.c.l.b16 %v91
    %v448 = vunpack.c.h.b16 %v91
    %v449 = vunpack.c.l.b16 %v92
    %v450 = vunpack.c.h.b16 %v92
    %v451 = vunpack.c.l.b16 %v93
    %v452 = vunpack.c.h.b16 %v93
    %v453 = vunpack.c.l.b16 %v94
    %v454 = vunpack.c.h.b16 %v94
    %v455 = vunpack.c.l.b16 %v95
    %v456 = vunpack.c.h.b16 %v95
    %v457 = vunpack.c.l.b16 %v96
    %v458 = vunpack.c.h.b16 %v96
    %v459 = vunpack.c.l.b16 %v97
    %v460 = vunpack.c.h.b16 %v97
    %v461 = vunpack.c.l.b16 %v98
    %v462 = vunpack.c.h.b16 %v98
    %v463 = vunpack.c.l.b16 %v99
    %v464 = vunpack.c.h.b16 %v99
    %v465 = vunpack.c.l.b16 %v100
    %v466 = vunpack.c.h.b16 %v100
    %v467 = vunpack.c.l.b16 %v101
    %v468 = vunpack.c.h.b16 %v101
    %v469 = vunpack.c.l.b16 %v102
    %v470 = vunpack.c.h.b16 %v102
    %v471 = vunpack.c.l.b16 %v103
    %v472 = vunpack.c.h.b16 %v103
    %v473 = vunpack.c.l.b16 %v104
    %v474 = vunpack.c.h.b16 %v104
    %v475 = vunpack.c.l.b16 %v105
    %v476 = vunpack.c.h.b16 %v105
    %v477 = vunpack.c.l.b16 %v106
    %v478 = vunpack.c.h.b16 %v106
    %v479 = vunpack.c.l.b16 %v107
    %v480 = vunpack.c.h.b16 %v107
    %v481 = vunpack.c.l.b16 %v108
    %v482 = vunpack.c.h.b16 %v108
    %v483 = vunpack.c.l.b16 %v109
    %v484 = vunpack.c.h.b16 %v109
    %v485 = vunpack.c.l.b16 %v110
    %v486 = vunpack.c.h.b16 %v110
    %v487 = vunpack.c.l.b16 %v111
    %v488 = vunpack.c.h.b16 %v111
    %v489 = vunpack.c.l.b16 %v112
    %v490 = vunpack.c.h.b16 %v112
    %v491 = vunpack.c.l.b16 %v113
    %v492 = vunpack.c.h.b16 %v113
    %v493 = vunpack.c.l.b16 %v114
    %v494 = vunpack.c.h.b16 %v114
    %v495 = vunpack.c.l.b16 %v115
    %v496 = vunpack.c.h.b16 %v115
    %v497 = vunpack.c.l.b16 %v116
    %v498 = vunpack.c.h.b16 %v116
    %v499 = vunpack.c.l.b16 %v117
    %v500 = vunpack.c.h.b16 %v117
    %v501 = vunpack.c.l.b16 %v118
    %v502 = vunpack.c.h.b16 %v118
    %v503 = vunpack.c.l.b16 %v119
    %v504 = vunpack.c.h.b16 %v119
    %v505 = vunpack.c.l.b16 %v120
    %v506 = vunpack.c.h.b16 %v120
    %v507 = vunpack.c.l.b16 %v121
    %v508 = vunpack.c.h.b16 %v121
    %v509 = vunpack.c.l.b16 %v122
    %v510 = vunpack.c.h.b16 %v122
    %v511 = vunpack.c.l.b16 %v123
    %v512 = vunpack.c.h.b16 %v123
    %v513 = vunpack.c.l.b16 %v124
    %v514 = vunpack.c.h.b16 %v124
    %v515 = vunpack.c.l.b16 %v125
    %v516 = vunpack.c.h.b16 %v125
    %v517 = vunpack.c.l.b16 %v126
    %v518 = vunpack.c.h.b16 %v126
    %v519 = vunpack.c.l.b16 %v127
    %v520 = vunpack.c.h.b16 %v127
    %v521 = vunpack.c.l.b16 %v128
    %v522 = vunpack.c.h.b16 %v128
    %v523 = vunpack.c.l.b16 %v129
    %v524 = vunpack.c.h.b16 %v129
    %v525 = vunpack.c.l.b16 %v130
    %v526 = vunpack.c.h.b16 %v130
    %v527 = vunpack.c.l.b16 %v131
    %v528 = vunpack.c.h.b16 %v131
    %v529 = vunpack.c.l.b16 %v132
    %v530 = vunpack.c.h.b16 %v132
    %v531 = vunpack.c.l.b16 %v133
    %v532 = vunpack.c.h.b16 %v133
    %v533 = vunpack.c.l.b16 %v134
    %v534 = vunpack.c.h.b16 %v134
    %v535 = vunpack.c.l.b16 %v135
    %v536 = vunpack.c.h.b16 %v135
    %v537 = vunpack.c.l.b16 %v136
    %v538 = vunpack.c.h.b16 %v136
    %v539 = vunpack.c.l.b16 %v137
    %v540 = vunpack.c.h.b16 %v137
    %v541 = vunpack.c.l.b16 %v138
    %v542 = vunpack.c.h.b16 %v138
    %v543 = vunpack.c.l.b16 %v139
    %v544 = vunpack.c.h.b16 %v139
    %v545 = vunpack.c.l.b16 %v140
    %v546 = vunpack.c.h.b16 %v140
    %v547 = vunpack.c.l.b16 %v141
    %v548 = vunpack.c.h.b16 %v141
    %v549 = vunpack.c.l.b16 %v142
    %v550 = vunpack.c.h.b16 %v142
    %v551 = vunpack.c.l.b16 %v143
    %v552 = vunpack.c.h.b16 %v143
    %v553 = vunpack.c.l.b16 %v144
    %v554 = vunpack.c.h.b16 %v144
    %v555 = vunpack.c.l.b16 %v145
    %v556 = vunpack.c.h.b16 %v145
    %v557 = vunpack.c.l.b16 %v146
    %v558 = vunpack.c.h.b16 %v146
    %v559 = vunpack.c.l.b16 %v147
    %v560 = vunpack.c.h.b16 %v147
    %v561 = vunpack.c.l.b16 %v148
    %v562 = vunpack.c.h.b16 %v148
    %v563 = vunpack.c.l.b16 %v149
    %v564 = vunpack.c.h.b16 %v149
    %v565 = vunpack.c.l.b16 %v150
    %v566 = vunpack.c.h.b16 %v150
    %v567 = vunpack.c.l.b16 %v151
    %v568 = vunpack.c.h.b16 %v151
    %v569 = vunpack.c.l.b16 %v152
    %v570 = vunpack.c.h.b16 %v152
    %v571 = vunpack.c.l.b16 %v153
    %v572 = vunpack.c.h.b16 %v153
    %v573 = vunpack.c.l.b16 %v154
    %v574 = vunpack.c.h.b16 %v154
    %v575 = vunpack.c.l.b16 %v155
    %v576 = vunpack.c.h.b16 %v155
    %v577 = vunpack.c.l.b16 %v156
    %v578 = vunpack.c.h.b16 %v156
    %v579 = vunpack.c.l.b16 %v157
    %v580 = vunpack.c.h.b16 %v157
    %v581 = vunpack.c.l.b16 %v158
    %v582 = vunpack.c.h.b16 %v158
    %v583 = vunpack.c.l.b16 %v159
    %v584 = vunpack.c.h.b16 %v159
    %v585 = vunpack.c.l.b16 %v160
    %v586 = vunpack.c.h.b16 %v160
    %v587 = vunpack.c.l.b16 %v161
    %v588 = vunpack.c.h.b16 %v161
    %v589 = vunpack.c.l.b16 %v162
    %v590 = vunpack.c.h.b16 %v162
    %v591 = vunpack.c.l.b16 %v163
    %v592 = vunpack.c.h.b16 %v163
    %v593 = vunpack.c.l.b16 %v164
    %v594 = vunpack.c.h.b16 %v164
    %v595 = vunpack.c.l.b16 %v165
    %v596 = vunpack.c.h.b16 %v165
    %v597 = vunpack.c.l.b16 %v166
    %v598 = vunpack.c.h.b16 %v166
    %v599 = vunpack.c.l.b16 %v167
    %v600 = vunpack.c.h.b16 %v167
    %v601 = vunpack.c.l.b16 %v168
    %v602 = vunpack.c.h.b16 %v168
    %v603 = vunpack.c.l.b16 %v169
    %v604 = vunpack.c.h.b16 %v169
    %v605 = vunpack.c.l.b16 %v170
    %v606 = vunpack.c.h.b16 %v170
    %v607 = vunpack.c.l.b16 %v171
    %v608 = vunpack.c.h.b16 %v171
    %v609 = vunpack.c.l.b16 %v172
    %v610 = vunpack.c.h.b16 %v172
    %v611 = vunpack.c.l.b16 %v173
    %v612 = vunpack.c.h.b16 %v173
    %v613 = vunpack.c.l.b16 %v174
    %v614 = vunpack.c.h.b16 %v174
    %v615 = vunpack.c.l.b16 %v175
    %v616 = vunpack.c.h.b16 %v175
    %v617 = vunpack.c.l.b16 %v176
    %v618 = vunpack.c.h.b16 %v176
    %v619 = vunpack.c.l.b16 %v177
    %v620 = vunpack.c.h.b16 %v177
    %v621 = vunpack.c.l.b16 %v178
    %v622 = vunpack.c.h.b16 %v178
    %v623 = vunpack.c.l.b16 %v179
    %v624 = vunpack.c.h.b16 %v179
    %v625 = vunpack.c.l.b16 %v180
    %v626 = vunpack.c.h.b16 %v180
    %v627 = vunpack.c.l.b16 %v181
    %v628 = vunpack.c.h.b16 %v181
    %v629 = vunpack.c.l.b16 %v182
    %v630 = vunpack.c.h.b16 %v182
    %v631 = vpack.c.b16 %v451, %v439
    %v632 = vpack.c.b16 %v452, %v440
    %v633 = vpack.c.b16 %v453, %v441
    %v634 = vpack.c.b16 %v454, %v442
    %v635 = vpack.c.b16 %v455, %v443
    %v636 = vpack.c.b16 %v456, %v444
    %v637 = vpack.c.b16 %v457, %v445
    %v638 = vpack.c.b16 %v458, %v446
    %v639 = vpack.c.b16 %v459, %v447
    %v640 = vpack.c.b16 %v460, %v448
    %v641 = vpack.c.b16 %v461, %v449
    %v642 = vpack.c.b16 %v462, %v450
    %v643 = vpack.c.b16 %v475, %v463
    %v644 = vpack.c.b16 %v476, %v464
    %v645 = vpack.c.b16 %v477, %v465
    %v646 = vpack.c.b16 %v478, %v466
    %v647 = vpack.c.b16 %v479, %v467
    %v648 = vpack.c.b16 %v480, %v468
    %v649 = vpack.c.b16 %v481, %v469
    %v650 = vpack.c.b16 %v482, %v470
    %v651 = vpack.c.b16 %v483, %v471
    %v652 = vpack.c.b16 %v484, %v472
    %v653 = vpack.c.b16 %v485, %v473
    %v654 = vpack.c.b16 %v486, %v474
    %v655 = vpack.c.b16 %v499, %v487
    %v656 = vpack.c.b16 %v500, %v488
    %v657 = vpack.c.b16 %v501, %v489
    %v658 = vpack.c.b16 %v502, %v490
    %v659 = vpack.c.b16 %v503, %v491
    %v660 = vpack.c.b16 %v504, %v492
    %v661 = vpack.c.b16 %v505, %v493
    %v662 = vpack.c.b16 %v506, %v494
    %v663 = vpack.c.b16 %v507, %v495
    %v664 = vpack.c.b16 %v508, %v496
    %v665 = vpack.c.b16 %v509, %v497
    %v666 = vpack.c.b16 %v510, %v498
    %v667 = vpack.c.b16 %v523, %v511
    %v668 = vpack.c.b16 %v524, %v512
    %v669 = vpack.c.b16 %v525, %v513
    %v670 = vpack.c.b16 %v526, %v514
    %v671 = vpack.c.b16 %v527, %v515
    %v672 = vpack.c.b16 %v528, %v516
    %v673 = vpack.c.b16 %v529, %v517
    %v674 = vpack.c.b16 %v530, %v518
    %v675 = vpack.c.b16 %v531, %v519
    %v676 = vpack.c.b16 %v532, %v520
    %v677 = vpack.c.b16 %v533, %v521
    %v678 = vpack.c.b16 %v534, %v522
    %v679 = vpack.c.b16 %v547, %v535
    %v680 = vpack.c.b16 %v548, %v536
    %v681 = vpack.c.b16 %v549, %v537
    %v682 = vpack.c.b16 %v550, %v538
    %v683 = vpack.c.b16 %v551, %v539
    %v684 = vpack.c.b16 %v552, %v540
    %v685 = vpack.c.b16 %v553, %v541
    %v686 = vpack.c.b16 %v554, %v542
    %v687 = vpack.c.b16 %v555, %v543
    %v688 = vpack.c.b16 %v556, %v544
    %v689 = vpack.c.b16 %v557, %v545
    %v690 = vpack.c.b16 %v558, %v546
    %v691 = vpack.c.b16 %v571, %v559
    %v692 = vpack.c.b16 %v572, %v560
    %v693 = vpack.c.b16 %v573, %v561
    %v694 = vpack.c.b16 %v574, %v562
    %v695 = vpack.c.b16 %v575, %v563
    %v696 = vpack.c.b16 %v576, %v564
    %v697 = vpack.c.b16 %v577, %v565
    %v698 = vpack.c.b16 %v578, %v566
    %v699 = vpack.c.b16 %v579, %v567
    %v700 = vpack.c.b16 %v580, %v568
    %v701 = vpack.c.b16 %v581, %v569
    %v702 = vpack.c.b16 %v582, %v570
    %v703 = vpack.c.b16 %v595, %v583
    %v704 = vpack.c.b16 %v596, %v584
    %v705 = vpack.c.b16 %v597, %v585
    %v706 = vpack.c.b16 %v598, %v586
    %v707 = vpack.c.b16 %v599, %v587
    %v708 = vpack.c.b16 %v600, %v588
    %v709 = vpack.c.b16 %v601, %v589
    %v710 = vpack.c.b16 %v602, %v590
    %v711 = vpack.c.b16 %v603, %v591
    %v712 = vpack.c.b16 %v604, %v592
    %v713 = vpack.c.b16 %v605, %v593
    %v714 = vpack.c.b16 %v606, %v594
    %v715 = vpack.c.b16 %v619, %v607
    %v716 = vpack.c.b16 %v620, %v608
    %v717 = vpack.c.b16 %v621, %v609
    %v718 = vpack.c.b16 %v622, %v610
    %v719 = vpack.c.b16 %v623, %v611
    %v720 = vpack.c.b16 %v624, %v612
    %v721 = vpack.c.b16 %v625, %v613
    %v722 = vpack.c.b16 %v626, %v614
    %v723 = vpack.c.b16 %v627, %v615
    %v724 = vpack.c.b16 %v628, %v616
    %v725 = vpack.c.b16 %v629, %v617
    %v726 = vpack.c.b16 %v630, %v618
    %823 = vmatprep.subr.bf16.mxu0 %v632
    %824 = vmatpush1.bf16.msra.mxu0 %v631
    %825 = vmatprep.subr.bf16.mxu0 %v644
    %826 = vmatpush1.bf16.msra.mxu0 %v643
    %827 = vmatprep.subr.bf16.mxu0 %v656
    %828 = vmatpush1.bf16.msra.mxu0 %v655
    %829 = vmatprep.subr.bf16.mxu0 %v668
    %830 = vmatpush1.bf16.msra.mxu0 %v667
    %831 = vmatprep.subr.bf16.mxu0 %v680
    %832 = vmatpush1.bf16.msra.mxu0 %v679
    %833 = vmatprep.subr.bf16.mxu0 %v692
    %834 = vmatpush1.bf16.msra.mxu0 %v691
    %835 = vmatprep.subr.bf16.mxu0 %v704
    %836 = vmatpush1.bf16.msra.mxu0 %v703
    %837 = vmatprep.subr.bf16.mxu0 %v716
    %838 = vmatpush1.bf16.msra.mxu0 %v715
    %839 = vmatprep.subr.bf16.mxu0 0
    %840 = vmatpush1.bf16.msra.mxu0 0
    %841 = vmatprep.subr.bf16.mxu0 0
    %842 = vmatpush1.bf16.msra.mxu0 0
    %843 = vmatprep.subr.bf16.mxu0 0
    %844 = vmatpush1.bf16.msra.mxu0 0
    %845 = vmatprep.subr.bf16.mxu0 0
    %846 = vmatpush1.bf16.msra.mxu0 0
    %847 = vmatprep.subr.bf16.mxu0 0
    %848 = vmatpush1.bf16.msra.mxu0 0
    %849 = vmatprep.subr.bf16.mxu0 0
    %850 = vmatpush1.bf16.msra.mxu0 0
    %851 = vmatprep.subr.bf16.mxu0 0
    %852 = vmatpush1.bf16.msra.mxu0 0
    %853 = vmatprep.subr.bf16.mxu0 0
    %854 = vmatpush1.bf16.msra.mxu0 0
    %855 = vmatprep.mubr.bf16.mxu0 0
    %856 = vmatmul.mubr.bf16.gmra.mrb[0].mxu0 %v311
    %v857 = vpop.f32.mrb[0].mxu0
    %v858 = vadd.f32 %v190, %v857
    %v859 = vpop.f32.mrb[0].mxu0
    %v860 = vadd.f32 %v194, %v859
    %v861 = vpop.f32.mrb[0].mxu0
    %v862 = vadd.f32 %v190, %v861
    %v863 = vpop.f32.mrb[0].mxu0
    %v864 = vadd.f32 %v194, %v863
    %865 = vmatprep.mubr.bf16.mxu0 0
    %866 = vmatmul.mubr.bf16.gmra.mrb[0].mxu0 %v312
    %v867 = vpop.f32.mrb[0].mxu0
    %v868 = vadd.f32 %v190, %v867
    %v869 = vpop.f32.mrb[0].mxu0
    %v870 = vadd.f32 %v194, %v869
    %v871 = vpop.f32.mrb[0].mxu0
    %v872 = vadd.f32 %v190, %v871
    %v873 = vpop.f32.mrb[0].mxu0
    %v874 = vadd.f32 %v194, %v873
    %875 = vmatprep.mubr.bf16.mxu0 0
    %876 = vmatmul.mubr.bf16.gmra.mrb[0].mxu0 %v313
    %v877 = vpop.f32.mrb[0].mxu0
    %v878 = vadd.f32 %v190, %v877
    %v879 = vpop.f32.mrb[0].mxu0
    %v880 = vadd.f32 %v194, %v879
    %v881 = vpop.f32.mrb[0].mxu0
    %v882 = vadd.f32 %v190, %v881
    %v883 = vpop.f32.mrb[0].mxu0
    %v884 = vadd.f32 %v194, %v883
    %885 = vmatprep.mubr.bf16.mxu0 0
    %886 = vmatmul.mubr.bf16.gmra.mrb[0].mxu0 %v314
    %v887 = vpop.f32.mrb[0].mxu0
    %v888 = vadd.f32 %v190, %v887
    %v889 = vpop.f32.mrb[0].mxu0
    %v890 = vadd.f32 %v194, %v889
    %v891 = vpop.f32.mrb[0].mxu0
    %v892 = vadd.f32 %v190, %v891
    %v893 = vpop.f32.mrb[0].mxu0
    %v894 = vadd.f32 %v194, %v893
    %895 = vmatprep.mubr.bf16.mxu0 0
    %896 = vmatmul.mubr.bf16.gmra.mrb[0].mxu0 %v315
    %v897 = vpop.f32.mrb[0].mxu0
    %v898 = vadd.f32 %v190, %v897
    %v899 = vpop.f32.mrb[0].mxu0
    %v900 = vadd.f32 %v194, %v899
    %v901 = vpop.f32.mrb[0].mxu0
    %v902 = vadd.f32 %v190, %v901
    %v903 = vpop.f32.mrb[0].mxu0
    %v904 = vadd.f32 %v194, %v903
    %905 = vmatprep.mubr.bf16.mxu0 0
    %906 = vmatmul.mubr.bf16.gmra.mrb[0].mxu0 %v316
    %v907 = vpop.f32.mrb[0].mxu0
    %v908 = vadd.f32 %v190, %v907
    %v909 = vpop.f32.mrb[0].mxu0
    %v910 = vadd.f32 %v194, %v909
    %v911 = vpop.f32.mrb[0].mxu0
    %v912 = vadd.f32 %v190, %v911
    %v913 = vpop.f32.mrb[0].mxu0
    %v914 = vadd.f32 %v194, %v913
    %915 = vmatprep.mubr.bf16.mxu0 0
    %916 = vmatmul.mubr.bf16.gmra.mrb[0].mxu0 %v317
    %v917 = vpop.f32.mrb[0].mxu0
    %v918 = vadd.f32 %v190, %v917
    %v919 = vpop.f32.mrb[0].mxu0
    %v920 = vadd.f32 %v194, %v919
    %v921 = vpop.f32.mrb[0].mxu0
    %v922 = vadd.f32 %v190, %v921
    %v923 = vpop.f32.mrb[0].mxu0
    %v924 = vadd.f32 %v194, %v923
    %925 = vmatprep.mubr.bf16.mxu0 0
    %926 = vmatmul.mubr.bf16.gmra.mrb[0].mxu0 %v318
    %v927 = vpop.f32.mrb[0].mxu0
    %v928 = vadd.f32 %v190, %v927
    %v929 = vpop.f32.mrb[0].mxu0
    %v930 = vadd.f32 %v194, %v929
    %v931 = vpop.f32.mrb[0].mxu0
    %v932 = vadd.f32 %v190, %v931
    %v933 = vpop.f32.mrb[0].mxu0
    %v934 = vadd.f32 %v194, %v933
    %935 = vmatprep.mubr.bf16.mxu0 0
    %936 = vmatmul.mubr.bf16.gmra.mrb[0].mxu0 %v319
    %v937 = vpop.f32.mrb[0].mxu0
    %v938 = vadd.f32 %v190, %v937
    %v939 = vpop.f32.mrb[0].mxu0
    %v940 = vadd.f32 %v194, %v939
    %v941 = vpop.f32.mrb[0].mxu0
    %v942 = vadd.f32 %v190, %v941
    %v943 = vpop.f32.mrb[0].mxu0
    %v944 = vadd.f32 %v194, %v943
    %945 = vmatprep.mubr.bf16.mxu0 0
    %946 = vmatmul.mubr.bf16.gmra.mrb[0].mxu0 %v320
    %v947 = vpop.f32.mrb[0].mxu0
    %v948 = vadd.f32 %v190, %v947
    %v949 = vpop.f32.mrb[0].mxu0
    %v950 = vadd.f32 %v194, %v949
    %v951 = vpop.f32.mrb[0].mxu0
    %v952 = vadd.f32 %v190, %v951
    %v953 = vpop.f32.mrb[0].mxu0
    %v954 = vadd.f32 %v194, %v953
    %955 = vmatprep.mubr.bf16.mxu0 0
    %956 = vmatmul.mubr.bf16.gmra.mrb[0].mxu0 %v321
    %v957 = vpop.f32.mrb[0].mxu0
    %v958 = vadd.f32 %v190, %v957
    %v959 = vpop.f32.mrb[0].mxu0
    %v960 = vadd.f32 %v194, %v959
    %v961 = vpop.f32.mrb[0].mxu0
    %v962 = vadd.f32 %v190, %v961
    %v963 = vpop.f32.mrb[0].mxu0
    %v964 = vadd.f32 %v194, %v963
    %965 = vmatprep.mubr.bf16.mxu0 0
    %966 = vmatmul.mubr.bf16.gmra.mrb[0].mxu0 %v322
    %v967 = vpop.f32.mrb[0].mxu0
    %v968 = vadd.f32 %v190, %v967
    %v969 = vpop.f32.mrb[0].mxu0
    %v970 = vadd.f32 %v194, %v969
    %v971 = vpop.f32.mrb[0].mxu0
    %v972 = vadd.f32 %v190, %v971
    %v973 = vpop.f32.mrb[0].mxu0
    %v974 = vadd.f32 %v194, %v973
    %975 = vmatprep.mubr.bf16.mxu0 0
    %976 = vmatmul.mubr.bf16.gmra.mrb[0].mxu0 %v323
    %v977 = vpop.f32.mrb[0].mxu0
    %v978 = vadd.f32 %v190, %v977
    %v979 = vpop.f32.mrb[0].mxu0
    %v980 = vadd.f32 %v194, %v979
    %v981 = vpop.f32.mrb[0].mxu0
    %v982 = vadd.f32 %v190, %v981
    %v983 = vpop.f32.mrb[0].mxu0
    %v984 = vadd.f32 %v194, %v983
    %985 = vmatprep.mubr.bf16.mxu0 0
    %986 = vmatmul.mubr.bf16.gmra.mrb[0].mxu0 %v324
    %v987 = vpop.f32.mrb[0].mxu0
    %v988 = vadd.f32 %v190, %v987
    %v989 = vpop.f32.mrb[0].mxu0
    %v990 = vadd.f32 %v194, %v989
    %v991 = vpop.f32.mrb[0].mxu0
    %v992 = vadd.f32 %v190, %v991
    %v993 = vpop.f32.mrb[0].mxu0
    %v994 = vadd.f32 %v194, %v993
    %995 = vmatprep.mubr.bf16.mxu0 0
    %996 = vmatmul.mubr.bf16.gmra.mrb[0].mxu0 %v325
    %v997 = vpop.f32.mrb[0].mxu0
    %v998 = vadd.f32 %v190, %v997
    %v999 = vpop.f32.mrb[0].mxu0
    %v1000 = vadd.f32 %v194, %v999
    %v1001 = vpop.f32.mrb[0].mxu0
    %v1002 = vadd.f32 %v190, %v1001
    %v1003 = vpop.f32.mrb[0].mxu0
    %v1004 = vadd.f32 %v194, %v1003
    %1005 = vmatprep.mubr.bf16.mxu0 0
    %1006 = vmatmul.mubr.bf16.gmra.mrb[0].mxu0 %v326
    %v1007 = vpop.f32.mrb[0].mxu0
    %v1008 = vadd.f32 %v190, %v1007
    %v1009 = vpop.f32.mrb[0].mxu0
    %v1010 = vadd.f32 %v194, %v1009
    %v1011 = vpop.f32.mrb[0].mxu0
    %v1012 = vadd.f32 %v190, %v1011
    %v1013 = vpop.f32.mrb[0].mxu0
    %v1014 = vadd.f32 %v194, %v1013
    %1015 = vdwg.mxu0
    %1016 = vmatprep.subr.bf16.mxu0 %v634
    %1017 = vmatpush1.bf16.msra.mxu0 %v633
    %1018 = vmatprep.subr.bf16.mxu0 %v646
    %1019 = vmatpush1.bf16.msra.mxu0 %v645
    %1020 = vmatprep.subr.bf16.mxu0 %v658
    %1021 = vmatpush1.bf16.msra.mxu0 %v657
    %1022 = vmatprep.subr.bf16.mxu0 %v670
    %1023 = vmatpush1.bf16.msra.mxu0 %v669
    %1024 = vmatprep.subr.bf16.mxu0 %v682
    %1025 = vmatpush1.bf16.msra.mxu0 %v681
    %1026 = vmatprep.subr.bf16.mxu0 %v694
    %1027 = vmatpush1.bf16.msra.mxu0 %v693
    %1028 = vmatprep.subr.bf16.mxu0 %v706
    %1029 = vmatpush1.bf16.msra.mxu0 %v705
    %1030 = vmatprep.subr.bf16.mxu0 %v718
    %1031 = vmatpush1.bf16.msra.mxu0 %v717
    %1032 = vmatprep.subr.bf16.mxu0 0
    %1033 = vmatpush1.bf16.msra.mxu0 0
    %1034 = vmatprep.subr.bf16.mxu0 0
    %1035 = vmatpush1.bf16.msra.mxu0 0
    %1036 = vmatprep.subr.bf16.mxu0 0
    %1037 = vmatpush1.bf16.msra.mxu0 0
    %1038 = vmatprep.subr.bf16.mxu0 0
    %1039 = vmatpush1.bf16.msra.mxu0 0
    %1040 = vmatprep.subr.bf16.mxu0 0
    %1041 = vmatpush1.bf16.msra.mxu0 0
    %1042 = vmatprep.subr.bf16.mxu0 0
    %1043 = vmatpush1.bf16.msra.mxu0 0
    %1044 = vmatprep.subr.bf16.mxu0 0
    %1045 = vmatpush1.bf16.msra.mxu0 0
    %1046 = vmatprep.subr.bf16.mxu0 0
    %1047 = vmatpush1.bf16.msra.mxu0 0
    %1048 = vmatprep.mubr.bf16.mxu0 0
    %1049 = vmatmul.mubr.bf16.gmra.mrb[0].mxu0 %v311
    %v1050 = vpop.f32.mrb[0].mxu0
    %v1051 = vadd.f32 %v198, %v1050
    %v1052 = vpop.f32.mrb[0].mxu0
    %v1053 = vadd.f32 %v202, %v1052
    %v1054 = vpop.f32.mrb[0].mxu0
    %v1055 = vadd.f32 %v198, %v1054
    %v1056 = vpop.f32.mrb[0].mxu0
    %v1057 = vadd.f32 %v202, %v1056
    %1058 = vmatprep.mubr.bf16.mxu0 0
    %1059 = vmatmul.mubr.bf16.gmra.mrb[0].mxu0 %v312
    %v1060 = vpop.f32.mrb[0].mxu0
    %v1061 = vadd.f32 %v198, %v1060
    %v1062 = vpop.f32.mrb[0].mxu0
    %v1063 = vadd.f32 %v202, %v1062
    %v1064 = vpop.f32.mrb[0].mxu0
    %v1065 = vadd.f32 %v198, %v1064
    %v1066 = vpop.f32.mrb[0].mxu0
    %v1067 = vadd.f32 %v202, %v1066
    %1068 = vmatprep.mubr.bf16.mxu0 0
    %1069 = vmatmul.mubr.bf16.gmra.mrb[0].mxu0 %v313
    %v1070 = vpop.f32.mrb[0].mxu0
    %v1071 = vadd.f32 %v198, %v1070
    %v1072 = vpop.f32.mrb[0].mxu0
    %v1073 = vadd.f32 %v202, %v1072
    %v1074 = vpop.f32.mrb[0].mxu0
    %v1075 = vadd.f32 %v198, %v1074
    %v1076 = vpop.f32.mrb[0].mxu0
    %v1077 = vadd.f32 %v202, %v1076
    %1078 = vmatprep.mubr.bf16.mxu0 0
    %1079 = vmatmul.mubr.bf16.gmra.mrb[0].mxu0 %v314
    %v1080 = vpop.f32.mrb[0].mxu0
    %v1081 = vadd.f32 %v198, %v1080
    %v1082 = vpop.f32.mrb[0].mxu0
    %v1083 = vadd.f32 %v202, %v1082
    %v1084 = vpop.f32.mrb[0].mxu0
    %v1085 = vadd.f32 %v198, %v1084
    %v1086 = vpop.f32.mrb[0].mxu0
    %v1087 = vadd.f32 %v202, %v1086
    %1088 = vmatprep.mubr.bf16.mxu0 0
    %1089 = vmatmul.mubr.bf16.gmra.mrb[0].mxu0 %v315
    %v1090 = vpop.f32.mrb[0].mxu0
    %v1091 = vadd.f32 %v198, %v1090
    %v1092 = vpop.f32.mrb[0].mxu0
    %v1093 = vadd.f32 %v202, %v1092
    %v1094 = vpop.f32.mrb[0].mxu0
    %v1095 = vadd.f32 %v198, %v1094
    %v1096 = vpop.f32.mrb[0].mxu0
    %v1097 = vadd.f32 %v202, %v1096
    %1098 = vmatprep.mubr.bf16.mxu0 0
    %1099 = vmatmul.mubr.bf16.gmra.mrb[0].mxu0 %v316
    %v1100 = vpop.f32.mrb[0].mxu0
    %v1101 = vadd.f32 %v198, %v1100
    %v1102 = vpop.f32.mrb[0].mxu0
    %v1103 = vadd.f32 %v202, %v1102
    %v1104 = vpop.f32.mrb[0].mxu0
    %v1105 = vadd.f32 %v198, %v1104
    %v1106 = vpop.f32.mrb[0].mxu0
    %v1107 = vadd.f32 %v202, %v1106
    %1108 = vmatprep.mubr.bf16.mxu0 0
    %1109 = vmatmul.mubr.bf16.gmra.mrb[0].mxu0 %v317
    %v1110 = vpop.f32.mrb[0].mxu0
    %v1111 = vadd.f32 %v198, %v1110
    %v1112 = vpop.f32.mrb[0].mxu0
    %v1113 = vadd.f32 %v202, %v1112
    %v1114 = vpop.f32.mrb[0].mxu0
    %v1115 = vadd.f32 %v198, %v1114
    %v1116 = vpop.f32.mrb[0].mxu0
    %v1117 = vadd.f32 %v202, %v1116
    %1118 = vmatprep.mubr.bf16.mxu0 0
    %1119 = vmatmul.mubr.bf16.gmra.mrb[0].mxu0 %v318
    %v1120 = vpop.f32.mrb[0].mxu0
    %v1121 = vadd.f32 %v198, %v1120
    %v1122 = vpop.f32.mrb[0].mxu0
    %v1123 = vadd.f32 %v202, %v1122
    %v1124 = vpop.f32.mrb[0].mxu0
    %v1125 = vadd.f32 %v198, %v1124
    %v1126 = vpop.f32.mrb[0].mxu0
    %v1127 = vadd.f32 %v202, %v1126
    %1128 = vmatprep.mubr.bf16.mxu0 0
    %1129 = vmatmul.mubr.bf16.gmra.mrb[0].mxu0 %v319
    %v1130 = vpop.f32.mrb[0].mxu0
    %v1131 = vadd.f32 %v198, %v1130
    %v1132 = vpop.f32.mrb[0].mxu0
    %v1133 = vadd.f32 %v202, %v1132
    %v1134 = vpop.f32.mrb[0].mxu0
    %v1135 = vadd.f32 %v198, %v1134
    %v1136 = vpop.f32.mrb[0].mxu0
    %v1137 = vadd.f32 %v202, %v1136
    %1138 = vmatprep.mubr.bf16.mxu0 0
    %1139 = vmatmul.mubr.bf16.gmra.mrb[0].mxu0 %v320
    %v1140 = vpop.f32.mrb[0].mxu0
    %v1141 = vadd.f32 %v198, %v1140
    %v1142 = vpop.f32.mrb[0].mxu0
    %v1143 = vadd.f32 %v202, %v1142
    %v1144 = vpop.f32.mrb[0].mxu0
    %v1145 = vadd.f32 %v198, %v1144
    %v1146 = vpop.f32.mrb[0].mxu0
    %v1147 = vadd.f32 %v202, %v1146
    %1148 = vmatprep.mubr.bf16.mxu0 0
    %1149 = vmatmul.mubr.bf16.gmra.mrb[0].mxu0 %v321
    %v1150 = vpop.f32.mrb[0].mxu0
    %v1151 = vadd.f32 %v198, %v1150
    %v1152 = vpop.f32.mrb[0].mxu0
    %v1153 = vadd.f32 %v202, %v1152
    %v1154 = vpop.f32.mrb[0].mxu0
    %v1155 = vadd.f32 %v198, %v1154
    %v1156 = vpop.f32.mrb[0].mxu0
    %v1157 = vadd.f32 %v202, %v1156
    %1158 = vmatprep.mubr.bf16.mxu0 0
    %1159 = vmatmul.mubr.bf16.gmra.mrb[0].mxu0 %v322
    %v1160 = vpop.f32.mrb[0].mxu0
    %v1161 = vadd.f32 %v198, %v1160
    %v1162 = vpop.f32.mrb[0].mxu0
    %v1163 = vadd.f32 %v202, %v1162
    %v1164 = vpop.f32.mrb[0].mxu0
    %v1165 = vadd.f32 %v198, %v1164
    %v1166 = vpop.f32.mrb[0].mxu0
    %v1167 = vadd.f32 %v202, %v1166
    %1168 = vmatprep.mubr.bf16.mxu0 0
    %1169 = vmatmul.mubr.bf16.gmra.mrb[0].mxu0 %v323
    %v1170 = vpop.f32.mrb[0].mxu0
    %v1171 = vadd.f32 %v198, %v1170
    %v1172 = vpop.f32.mrb[0].mxu0
    %v1173 = vadd.f32 %v202, %v1172
    %v1174 = vpop.f32.mrb[0].mxu0
    %v1175 = vadd.f32 %v198, %v1174
    %v1176 = vpop.f32.mrb[0].mxu0
    %v1177 = vadd.f32 %v202, %v1176
    %1178 = vmatprep.mubr.bf16.mxu0 0
    %1179 = vmatmul.mubr.bf16.gmra.mrb[0].mxu0 %v324
    %v1180 = vpop.f32.mrb[0].mxu0
    %v1181 = vadd.f32 %v198, %v1180
    %v1182 = vpop.f32.mrb[0].mxu0
    %v1183 = vadd.f32 %v202, %v1182
    %v1184 = vpop.f32.mrb[0].mxu0
    %v1185 = vadd.f32 %v198, %v1184
    %v1186 = vpop.f32.mrb[0].mxu0
    %v1187 = vadd.f32 %v202, %v1186
    %1188 = vmatprep.mubr.bf16.mxu0 0
    %1189 = vmatmul.mubr.bf16.gmra.mrb[0].mxu0 %v325
    %v1190 = vpop.f32.mrb[0].mxu0
    %v1191 = vadd.f32 %v198, %v1190
    %v1192 = vpop.f32.mrb[0].mxu0
    %v1193 = vadd.f32 %v202, %v1192
    %v1194 = vpop.f32.mrb[0].mxu0
    %v1195 = vadd.f32 %v198, %v1194
    %v1196 = vpop.f32.mrb[0].mxu0
    %v1197 = vadd.f32 %v202, %v1196
    %1198 = vmatprep.mubr.bf16.mxu0 0
    %1199 = vmatmul.mubr.bf16.gmra.mrb[0].mxu0 %v326
    %v1200 = vpop.f32.mrb[0].mxu0
    %v1201 = vadd.f32 %v198, %v1200
    %v1202 = vpop.f32.mrb[0].mxu0
    %v1203 = vadd.f32 %v202, %v1202
    %v1204 = vpop.f32.mrb[0].mxu0
    %v1205 = vadd.f32 %v198, %v1204
    %v1206 = vpop.f32.mrb[0].mxu0
    %v1207 = vadd.f32 %v202, %v1206
    %1208 = vdwg.mxu0
    %1209 = vmatprep.subr.bf16.mxu0 %v636
    %1210 = vmatpush1.bf16.msra.mxu0 %v635
    %1211 = vmatprep.subr.bf16.mxu0 %v648
    %1212 = vmatpush1.bf16.msra.mxu0 %v647
    %1213 = vmatprep.subr.bf16.mxu0 %v660
    %1214 = vmatpush1.bf16.msra.mxu0 %v659
    %1215 = vmatprep.subr.bf16.mxu0 %v672
    %1216 = vmatpush1.bf16.msra.mxu0 %v671
    %1217 = vmatprep.subr.bf16.mxu0 %v684
    %1218 = vmatpush1.bf16.msra.mxu0 %v683
    %1219 = vmatprep.subr.bf16.mxu0 %v696
    %1220 = vmatpush1.bf16.msra.mxu0 %v695
    %1221 = vmatprep.subr.bf16.mxu0 %v708
    %1222 = vmatpush1.bf16.msra.mxu0 %v707
    %1223 = vmatprep.subr.bf16.mxu0 %v720
    %1224 = vmatpush1.bf16.msra.mxu0 %v719
    %1225 = vmatprep.subr.bf16.mxu0 0
    %1226 = vmatpush1.bf16.msra.mxu0 0
    %1227 = vmatprep.subr.bf16.mxu0 0
    %1228 = vmatpush1.bf16.msra.mxu0 0
    %1229 = vmatprep.subr.bf16.mxu0 0
    %1230 = vmatpush1.bf16.msra.mxu0 0
    %1231 = vmatprep.subr.bf16.mxu0 0
    %1232 = vmatpush1.bf16.msra.mxu0 0
    %1233 = vmatprep.subr.bf16.mxu0 0
    %1234 = vmatpush1.bf16.msra.mxu0 0
    %1235 = vmatprep.subr.bf16.mxu0 0
    %1236 = vmatpush1.bf16.msra.mxu0 0
    %1237 = vmatprep.subr.bf16.mxu0 0
    %1238 = vmatpush1.bf16.msra.mxu0 0
    %1239 = vmatprep.subr.bf16.mxu0 0
    %1240 = vmatpush1.bf16.msra.mxu0 0
    %1241 = vmatprep.mubr.bf16.mxu0 0
    %1242 = vmatmul.mubr.bf16.gmra.mrb[0].mxu0 %v311
    %v1243 = vpop.f32.mrb[0].mxu0
    %v1244 = vadd.f32 %v206, %v1243
    %v1245 = vpop.f32.mrb[0].mxu0
    %v1246 = vadd.f32 %v210, %v1245
    %v1247 = vpop.f32.mrb[0].mxu0
    %v1248 = vadd.f32 %v206, %v1247
    %v1249 = vpop.f32.mrb[0].mxu0
    %v1250 = vadd.f32 %v210, %v1249
    %1251 = vmatprep.mubr.bf16.mxu0 0
    %1252 = vmatmul.mubr.bf16.gmra.mrb[0].mxu0 %v312
    %v1253 = vpop.f32.mrb[0].mxu0
    %v1254 = vadd.f32 %v206, %v1253
    %v1255 = vpop.f32.mrb[0].mxu0
    %v1256 = vadd.f32 %v210, %v1255
    %v1257 = vpop.f32.mrb[0].mxu0
    %v1258 = vadd.f32 %v206, %v1257
    %v1259 = vpop.f32.mrb[0].mxu0
    %v1260 = vadd.f32 %v210, %v1259
    %1261 = vmatprep.mubr.bf16.mxu0 0
    %1262 = vmatmul.mubr.bf16.gmra.mrb[0].mxu0 %v313
    %v1263 = vpop.f32.mrb[0].mxu0
    %v1264 = vadd.f32 %v206, %v1263
    %v1265 = vpop.f32.mrb[0].mxu0
    %v1266 = vadd.f32 %v210, %v1265
    %v1267 = vpop.f32.mrb[0].mxu0
    %v1268 = vadd.f32 %v206, %v1267
    %v1269 = vpop.f32.mrb[0].mxu0
    %v1270 = vadd.f32 %v210, %v1269
    %1271 = vmatprep.mubr.bf16.mxu0 0
    %1272 = vmatmul.mubr.bf16.gmra.mrb[0].mxu0 %v314
    %v1273 = vpop.f32.mrb[0].mxu0
    %v1274 = vadd.f32 %v206, %v1273
    %v1275 = vpop.f32.mrb[0].mxu0
    %v1276 = vadd.f32 %v210, %v1275
    %v1277 = vpop.f32.mrb[0].mxu0
    %v1278 = vadd.f32 %v206, %v1277
    %v1279 = vpop.f32.mrb[0].mxu0
    %v1280 = vadd.f32 %v210, %v1279
    %1281 = vmatprep.mubr.bf16.mxu0 0
    %1282 = vmatmul.mubr.bf16.gmra.mrb[0].mxu0 %v315
    %v1283 = vpop.f32.mrb[0].mxu0
    %v1284 = vadd.f32 %v206, %v1283
    %v1285 = vpop.f32.mrb[0].mxu0
    %v1286 = vadd.f32 %v210, %v1285
    %v1287 = vpop.f32.mrb[0].mxu0
    %v1288 = vadd.f32 %v206, %v1287
    %v1289 = vpop.f32.mrb[0].mxu0
    %v1290 = vadd.f32 %v210, %v1289
    %1291 = vmatprep.mubr.bf16.mxu0 0
    %1292 = vmatmul.mubr.bf16.gmra.mrb[0].mxu0 %v316
    %v1293 = vpop.f32.mrb[0].mxu0
    %v1294 = vadd.f32 %v206, %v1293
    %v1295 = vpop.f32.mrb[0].mxu0
    %v1296 = vadd.f32 %v210, %v1295
    %v1297 = vpop.f32.mrb[0].mxu0
    %v1298 = vadd.f32 %v206, %v1297
    %v1299 = vpop.f32.mrb[0].mxu0
    %v1300 = vadd.f32 %v210, %v1299
    %1301 = vmatprep.mubr.bf16.mxu0 0
    %1302 = vmatmul.mubr.bf16.gmra.mrb[0].mxu0 %v317
    %v1303 = vpop.f32.mrb[0].mxu0
    %v1304 = vadd.f32 %v206, %v1303
    %v1305 = vpop.f32.mrb[0].mxu0
    %v1306 = vadd.f32 %v210, %v1305
    %v1307 = vpop.f32.mrb[0].mxu0
    %v1308 = vadd.f32 %v206, %v1307
    %v1309 = vpop.f32.mrb[0].mxu0
    %v1310 = vadd.f32 %v210, %v1309
    %1311 = vmatprep.mubr.bf16.mxu0 0
    %1312 = vmatmul.mubr.bf16.gmra.mrb[0].mxu0 %v318
    %v1313 = vpop.f32.mrb[0].mxu0
    %v1314 = vadd.f32 %v206, %v1313
    %v1315 = vpop.f32.mrb[0].mxu0
    %v1316 = vadd.f32 %v210, %v1315
    %v1317 = vpop.f32.mrb[0].mxu0
    %v1318 = vadd.f32 %v206, %v1317
    %v1319 = vpop.f32.mrb[0].mxu0
    %v1320 = vadd.f32 %v210, %v1319
    %1321 = vmatprep.mubr.bf16.mxu0 0
    %1322 = vmatmul.mubr.bf16.gmra.mrb[0].mxu0 %v319
    %v1323 = vpop.f32.mrb[0].mxu0
    %v1324 = vadd.f32 %v206, %v1323
    %v1325 = vpop.f32.mrb[0].mxu0
    %v1326 = vadd.f32 %v210, %v1325
    %v1327 = vpop.f32.mrb[0].mxu0
    %v1328 = vadd.f32 %v206, %v1327
    %v1329 = vpop.f32.mrb[0].mxu0
    %v1330 = vadd.f32 %v210, %v1329
    %1331 = vmatprep.mubr.bf16.mxu0 0
    %1332 = vmatmul.mubr.bf16.gmra.mrb[0].mxu0 %v320
    %v1333 = vpop.f32.mrb[0].mxu0
    %v1334 = vadd.f32 %v206, %v1333
    %v1335 = vpop.f32.mrb[0].mxu0
    %v1336 = vadd.f32 %v210, %v1335
    %v1337 = vpop.f32.mrb[0].mxu0
    %v1338 = vadd.f32 %v206, %v1337
    %v1339 = vpop.f32.mrb[0].mxu0
    %v1340 = vadd.f32 %v210, %v1339
    %1341 = vmatprep.mubr.bf16.mxu0 0
    %1342 = vmatmul.mubr.bf16.gmra.mrb[0].mxu0 %v321
    %v1343 = vpop.f32.mrb[0].mxu0
    %v1344 = vadd.f32 %v206, %v1343
    %v1345 = vpop.f32.mrb[0].mxu0
    %v1346 = vadd.f32 %v210, %v1345
    %v1347 = vpop.f32.mrb[0].mxu0
    %v1348 = vadd.f32 %v206, %v1347
    %v1349 = vpop.f32.mrb[0].mxu0
    %v1350 = vadd.f32 %v210, %v1349
    %1351 = vmatprep.mubr.bf16.mxu0 0
    %1352 = vmatmul.mubr.bf16.gmra.mrb[0].mxu0 %v322
    %v1353 = vpop.f32.mrb[0].mxu0
    %v1354 = vadd.f32 %v206, %v1353
    %v1355 = vpop.f32.mrb[0].mxu0
    %v1356 = vadd.f32 %v210, %v1355
    %v1357 = vpop.f32.mrb[0].mxu0
    %v1358 = vadd.f32 %v206, %v1357
    %v1359 = vpop.f32.mrb[0].mxu0
    %v1360 = vadd.f32 %v210, %v1359
    %1361 = vmatprep.mubr.bf16.mxu0 0
    %1362 = vmatmul.mubr.bf16.gmra.mrb[0].mxu0 %v323
    %v1363 = vpop.f32.mrb[0].mxu0
    %v1364 = vadd.f32 %v206, %v1363
    %v1365 = vpop.f32.mrb[0].mxu0
    %v1366 = vadd.f32 %v210, %v1365
    %v1367 = vpop.f32.mrb[0].mxu0
    %v1368 = vadd.f32 %v206, %v1367
    %v1369 = vpop.f32.mrb[0].mxu0
    %v1370 = vadd.f32 %v210, %v1369
    %1371 = vmatprep.mubr.bf16.mxu0 0
    %1372 = vmatmul.mubr.bf16.gmra.mrb[0].mxu0 %v324
    %v1373 = vpop.f32.mrb[0].mxu0
    %v1374 = vadd.f32 %v206, %v1373
    %v1375 = vpop.f32.mrb[0].mxu0
    %v1376 = vadd.f32 %v210, %v1375
    %v1377 = vpop.f32.mrb[0].mxu0
    %v1378 = vadd.f32 %v206, %v1377
    %v1379 = vpop.f32.mrb[0].mxu0
    %v1380 = vadd.f32 %v210, %v1379
    %1381 = vmatprep.mubr.bf16.mxu0 0
    %1382 = vmatmul.mubr.bf16.gmra.mrb[0].mxu0 %v325
    %v1383 = vpop.f32.mrb[0].mxu0
    %v1384 = vadd.f32 %v206, %v1383
    %v1385 = vpop.f32.mrb[0].mxu0
    %v1386 = vadd.f32 %v210, %v1385
    %v1387 = vpop.f32.mrb[0].mxu0
    %v1388 = vadd.f32 %v206, %v1387
    %v1389 = vpop.f32.mrb[0].mxu0
    %v1390 = vadd.f32 %v210, %v1389
    %1391 = vmatprep.mubr.bf16.mxu0 0
    %1392 = vmatmul.mubr.bf16.gmra.mrb[0].mxu0 %v326
    %v1393 = vpop.f32.mrb[0].mxu0
    %v1394 = vadd.f32 %v206, %v1393
    %v1395 = vpop.f32.mrb[0].mxu0
    %v1396 = vadd.f32 %v210, %v1395
    %v1397 = vpop.f32.mrb[0].mxu0
    %v1398 = vadd.f32 %v206, %v1397
    %v1399 = vpop.f32.mrb[0].mxu0
    %v1400 = vadd.f32 %v210, %v1399
    %1401 = vdwg.mxu0
    %1402 = vmatprep.subr.bf16.mxu0 %v638
    %1403 = vmatpush1.bf16.msra.mxu0 %v637
    %1404 = vmatprep.subr.bf16.mxu0 %v650
    %1405 = vmatpush1.bf16.msra.mxu0 %v649
    %1406 = vmatprep.subr.bf16.mxu0 %v662
    %1407 = vmatpush1.bf16.msra.mxu0 %v661
    %1408 = vmatprep.subr.bf16.mxu0 %v674
    %1409 = vmatpush1.bf16.msra.mxu0 %v673
    %1410 = vmatprep.subr.bf16.mxu0 %v686
    %1411 = vmatpush1.bf16.msra.mxu0 %v685
    %1412 = vmatprep.subr.bf16.mxu0 %v698
    %1413 = vmatpush1.bf16.msra.mxu0 %v697
    %1414 = vmatprep.subr.bf16.mxu0 %v710
    %1415 = vmatpush1.bf16.msra.mxu0 %v709
    %1416 = vmatprep.subr.bf16.mxu0 %v722
    %1417 = vmatpush1.bf16.msra.mxu0 %v721
    %1418 = vmatprep.subr.bf16.mxu0 0
    %1419 = vmatpush1.bf16.msra.mxu0 0
    %1420 = vmatprep.subr.bf16.mxu0 0
    %1421 = vmatpush1.bf16.msra.mxu0 0
    %1422 = vmatprep.subr.bf16.mxu0 0
    %1423 = vmatpush1.bf16.msra.mxu0 0
    %1424 = vmatprep.subr.bf16.mxu0 0
    %1425 = vmatpush1.bf16.msra.mxu0 0
    %1426 = vmatprep.subr.bf16.mxu0 0
    %1427 = vmatpush1.bf16.msra.mxu0 0
    %1428 = vmatprep.subr.bf16.mxu0 0
    %1429 = vmatpush1.bf16.msra.mxu0 0
    %1430 = vmatprep.subr.bf16.mxu0 0
    %1431 = vmatpush1.bf16.msra.mxu0 0
    %1432 = vmatprep.subr.bf16.mxu0 0
    %1433 = vmatpush1.bf16.msra.mxu0 0
    %1434 = vmatprep.mubr.bf16.mxu0 0
    %1435 = vmatmul.mubr.bf16.gmra.mrb[0].mxu0 %v311
    %v1436 = vpop.f32.mrb[0].mxu0
    %v1437 = vadd.f32 %v214, %v1436
    %v1438 = vpop.f32.mrb[0].mxu0
    %v1439 = vadd.f32 %v218, %v1438
    %v1440 = vpop.f32.mrb[0].mxu0
    %v1441 = vadd.f32 %v214, %v1440
    %v1442 = vpop.f32.mrb[0].mxu0
    %v1443 = vadd.f32 %v218, %v1442
    %1444 = vmatprep.mubr.bf16.mxu0 0
    %1445 = vmatmul.mubr.bf16.gmra.mrb[0].mxu0 %v312
    %v1446 = vpop.f32.mrb[0].mxu0
    %v1447 = vadd.f32 %v214, %v1446
    %v1448 = vpop.f32.mrb[0].mxu0
    %v1449 = vadd.f32 %v218, %v1448
    %v1450 = vpop.f32.mrb[0].mxu0
    %v1451 = vadd.f32 %v214, %v1450
    %v1452 = vpop.f32.mrb[0].mxu0
    %v1453 = vadd.f32 %v218, %v1452
    %1454 = vmatprep.mubr.bf16.mxu0 0
    %1455 = vmatmul.mubr.bf16.gmra.mrb[0].mxu0 %v313
    %v1456 = vpop.f32.mrb[0].mxu0
    %v1457 = vadd.f32 %v214, %v1456
    %v1458 = vpop.f32.mrb[0].mxu0
    %v1459 = vadd.f32 %v218, %v1458
    %v1460 = vpop.f32.mrb[0].mxu0
    %v1461 = vadd.f32 %v214, %v1460
    %v1462 = vpop.f32.mrb[0].mxu0
    %v1463 = vadd.f32 %v218, %v1462
    %1464 = vmatprep.mubr.bf16.mxu0 0
    %1465 = vmatmul.mubr.bf16.gmra.mrb[0].mxu0 %v314
    %v1466 = vpop.f32.mrb[0].mxu0
    %v1467 = vadd.f32 %v214, %v1466
    %v1468 = vpop.f32.mrb[0].mxu0
    %v1469 = vadd.f32 %v218, %v1468
    %v1470 = vpop.f32.mrb[0].mxu0
    %v1471 = vadd.f32 %v214, %v1470
    %v1472 = vpop.f32.mrb[0].mxu0
    %v1473 = vadd.f32 %v218, %v1472
    %1474 = vmatprep.mubr.bf16.mxu0 0
    %1475 = vmatmul.mubr.bf16.gmra.mrb[0].mxu0 %v315
    %v1476 = vpop.f32.mrb[0].mxu0
    %v1477 = vadd.f32 %v214, %v1476
    %v1478 = vpop.f32.mrb[0].mxu0
    %v1479 = vadd.f32 %v218, %v1478
    %v1480 = vpop.f32.mrb[0].mxu0
    %v1481 = vadd.f32 %v214, %v1480
    %v1482 = vpop.f32.mrb[0].mxu0
    %v1483 = vadd.f32 %v218, %v1482
    %1484 = vmatprep.mubr.bf16.mxu0 0
    %1485 = vmatmul.mubr.bf16.gmra.mrb[0].mxu0 %v316
    %v1486 = vpop.f32.mrb[0].mxu0
    %v1487 = vadd.f32 %v214, %v1486
    %v1488 = vpop.f32.mrb[0].mxu0
    %v1489 = vadd.f32 %v218, %v1488
    %v1490 = vpop.f32.mrb[0].mxu0
    %v1491 = vadd.f32 %v214, %v1490
    %v1492 = vpop.f32.mrb[0].mxu0
    %v1493 = vadd.f32 %v218, %v1492
    %1494 = vmatprep.mubr.bf16.mxu0 0
    %1495 = vmatmul.mubr.bf16.gmra.mrb[0].mxu0 %v317
    %v1496 = vpop.f32.mrb[0].mxu0
    %v1497 = vadd.f32 %v214, %v1496
    %v1498 = vpop.f32.mrb[0].mxu0
    %v1499 = vadd.f32 %v218, %v1498
    %v1500 = vpop.f32.mrb[0].mxu0
    %v1501 = vadd.f32 %v214, %v1500
    %v1502 = vpop.f32.mrb[0].mxu0
    %v1503 = vadd.f32 %v218, %v1502
    %1504 = vmatprep.mubr.bf16.mxu0 0
    %1505 = vmatmul.mubr.bf16.gmra.mrb[0].mxu0 %v318
    %v1506 = vpop.f32.mrb[0].mxu0
    %v1507 = vadd.f32 %v214, %v1506
    %v1508 = vpop.f32.mrb[0].mxu0
    %v1509 = vadd.f32 %v218, %v1508
    %v1510 = vpop.f32.mrb[0].mxu0
    %v1511 = vadd.f32 %v214, %v1510
    %v1512 = vpop.f32.mrb[0].mxu0
    %v1513 = vadd.f32 %v218, %v1512
    %1514 = vmatprep.mubr.bf16.mxu0 0
    %1515 = vmatmul.mubr.bf16.gmra.mrb[0].mxu0 %v319
    %v1516 = vpop.f32.mrb[0].mxu0
    %v1517 = vadd.f32 %v214, %v1516
    %v1518 = vpop.f32.mrb[0].mxu0
    %v1519 = vadd.f32 %v218, %v1518
    %v1520 = vpop.f32.mrb[0].mxu0
    %v1521 = vadd.f32 %v214, %v1520
    %v1522 = vpop.f32.mrb[0].mxu0
    %v1523 = vadd.f32 %v218, %v1522
    %1524 = vmatprep.mubr.bf16.mxu0 0
    %1525 = vmatmul.mubr.bf16.gmra.mrb[0].mxu0 %v320
    %v1526 = vpop.f32.mrb[0].mxu0
    %v1527 = vadd.f32 %v214, %v1526
    %v1528 = vpop.f32.mrb[0].mxu0
    %v1529 = vadd.f32 %v218, %v1528
    %v1530 = vpop.f32.mrb[0].mxu0
    %v1531 = vadd.f32 %v214, %v1530
    %v1532 = vpop.f32.mrb[0].mxu0
    %v1533 = vadd.f32 %v218, %v1532
    %1534 = vmatprep.mubr.bf16.mxu0 0
    %1535 = vmatmul.mubr.bf16.gmra.mrb[0].mxu0 %v321
    %v1536 = vpop.f32.mrb[0].mxu0
    %v1537 = vadd.f32 %v214, %v1536
    %v1538 = vpop.f32.mrb[0].mxu0
    %v1539 = vadd.f32 %v218, %v1538
    %v1540 = vpop.f32.mrb[0].mxu0
    %v1541 = vadd.f32 %v214, %v1540
    %v1542 = vpop.f32.mrb[0].mxu0
    %v1543 = vadd.f32 %v218, %v1542
    %1544 = vmatprep.mubr.bf16.mxu0 0
    %1545 = vmatmul.mubr.bf16.gmra.mrb[0].mxu0 %v322
    %v1546 = vpop.f32.mrb[0].mxu0
    %v1547 = vadd.f32 %v214, %v1546
    %v1548 = vpop.f32.mrb[0].mxu0
    %v1549 = vadd.f32 %v218, %v1548
    %v1550 = vpop.f32.mrb[0].mxu0
    %v1551 = vadd.f32 %v214, %v1550
    %v1552 = vpop.f32.mrb[0].mxu0
    %v1553 = vadd.f32 %v218, %v1552
    %1554 = vmatprep.mubr.bf16.mxu0 0
    %1555 = vmatmul.mubr.bf16.gmra.mrb[0].mxu0 %v323
    %v1556 = vpop.f32.mrb[0].mxu0
    %v1557 = vadd.f32 %v214, %v1556
    %v1558 = vpop.f32.mrb[0].mxu0
    %v1559 = vadd.f32 %v218, %v1558
    %v1560 = vpop.f32.mrb[0].mxu0
    %v1561 = vadd.f32 %v214, %v1560
    %v1562 = vpop.f32.mrb[0].mxu0
    %v1563 = vadd.f32 %v218, %v1562
    %1564 = vmatprep.mubr.bf16.mxu0 0
    %1565 = vmatmul.mubr.bf16.gmra.mrb[0].mxu0 %v324
    %v1566 = vpop.f32.mrb[0].mxu0
    %v1567 = vadd.f32 %v214, %v1566
    %v1568 = vpop.f32.mrb[0].mxu0
    %v1569 = vadd.f32 %v218, %v1568
    %v1570 = vpop.f32.mrb[0].mxu0
    %v1571 = vadd.f32 %v214, %v1570
    %v1572 = vpop.f32.mrb[0].mxu0
    %v1573 = vadd.f32 %v218, %v1572
    %1574 = vmatprep.mubr.bf16.mxu0 0
    %1575 = vmatmul.mubr.bf16.gmra.mrb[0].mxu0 %v325
    %v1576 = vpop.f32.mrb[0].mxu0
    %v1577 = vadd.f32 %v214, %v1576
    %v1578 = vpop.f32.mrb[0].mxu0
    %v1579 = vadd.f32 %v218, %v1578
    %v1580 = vpop.f32.mrb[0].mxu0
    %v1581 = vadd.f32 %v214, %v1580
    %v1582 = vpop.f32.mrb[0].mxu0
    %v1583 = vadd.f32 %v218, %v1582
    %1584 = vmatprep.mubr.bf16.mxu0 0
    %1585 = vmatmul.mubr.bf16.gmra.mrb[0].mxu0 %v326
    %v1586 = vpop.f32.mrb[0].mxu0
    %v1587 = vadd.f32 %v214, %v1586
    %v1588 = vpop.f32.mrb[0].mxu0
    %v1589 = vadd.f32 %v218, %v1588
    %v1590 = vpop.f32.mrb[0].mxu0
    %v1591 = vadd.f32 %v214, %v1590
    %v1592 = vpop.f32.mrb[0].mxu0
    %v1593 = vadd.f32 %v218, %v1592
    %1594 = vdwg.mxu0
    %1595 = vmatprep.subr.bf16.mxu0 %v640
    %1596 = vmatpush1.bf16.msra.mxu0 %v639
    %1597 = vmatprep.subr.bf16.mxu0 %v652
    %1598 = vmatpush1.bf16.msra.mxu0 %v651
    %1599 = vmatprep.subr.bf16.mxu0 %v664
    %1600 = vmatpush1.bf16.msra.mxu0 %v663
    %1601 = vmatprep.subr.bf16.mxu0 %v676
    %1602 = vmatpush1.bf16.msra.mxu0 %v675
    %1603 = vmatprep.subr.bf16.mxu0 %v688
    %1604 = vmatpush1.bf16.msra.mxu0 %v687
    %1605 = vmatprep.subr.bf16.mxu0 %v700
    %1606 = vmatpush1.bf16.msra.mxu0 %v699
    %1607 = vmatprep.subr.bf16.mxu0 %v712
    %1608 = vmatpush1.bf16.msra.mxu0 %v711
    %1609 = vmatprep.subr.bf16.mxu0 %v724
    %1610 = vmatpush1.bf16.msra.mxu0 %v723
    %1611 = vmatprep.subr.bf16.mxu0 0
    %1612 = vmatpush1.bf16.msra.mxu0 0
    %1613 = vmatprep.subr.bf16.mxu0 0
    %1614 = vmatpush1.bf16.msra.mxu0 0
    %1615 = vmatprep.subr.bf16.mxu0 0
    %1616 = vmatpush1.bf16.msra.mxu0 0
    %1617 = vmatprep.subr.bf16.mxu0 0
    %1618 = vmatpush1.bf16.msra.mxu0 0
    %1619 = vmatprep.subr.bf16.mxu0 0
    %1620 = vmatpush1.bf16.msra.mxu0 0
    %1621 = vmatprep.subr.bf16.mxu0 0
    %1622 = vmatpush1.bf16.msra.mxu0 0
    %1623 = vmatprep.subr.bf16.mxu0 0
    %1624 = vmatpush1.bf16.msra.mxu0 0
    %1625 = vmatprep.subr.bf16.mxu0 0
    %1626 = vmatpush1.bf16.msra.mxu0 0
    %1627 = vmatprep.mubr.bf16.mxu0 0
    %1628 = vmatmul.mubr.bf16.gmra.mrb[0].mxu0 %v311
    %v1629 = vpop.f32.mrb[0].mxu0
    %v1630 = vadd.f32 %v222, %v1629
    %v1631 = vpop.f32.mrb[0].mxu0
    %v1632 = vadd.f32 %v226, %v1631
    %v1633 = vpop.f32.mrb[0].mxu0
    %v1634 = vadd.f32 %v222, %v1633
    %v1635 = vpop.f32.mrb[0].mxu0
    %v1636 = vadd.f32 %v226, %v1635
    %1637 = vmatprep.mubr.bf16.mxu0 0
    %1638 = vmatmul.mubr.bf16.gmra.mrb[0].mxu0 %v312
    %v1639 = vpop.f32.mrb[0].mxu0
    %v1640 = vadd.f32 %v222, %v1639
    %v1641 = vpop.f32.mrb[0].mxu0
    %v1642 = vadd.f32 %v226, %v1641
    %v1643 = vpop.f32.mrb[0].mxu0
    %v1644 = vadd.f32 %v222, %v1643
    %v1645 = vpop.f32.mrb[0].mxu0
    %v1646 = vadd.f32 %v226, %v1645
    %1647 = vmatprep.mubr.bf16.mxu0 0
    %1648 = vmatmul.mubr.bf16.gmra.mrb[0].mxu0 %v313
    %v1649 = vpop.f32.mrb[0].mxu0
    %v1650 = vadd.f32 %v222, %v1649
    %v1651 = vpop.f32.mrb[0].mxu0
    %v1652 = vadd.f32 %v226, %v1651
    %v1653 = vpop.f32.mrb[0].mxu0
    %v1654 = vadd.f32 %v222, %v1653
    %v1655 = vpop.f32.mrb[0].mxu0
    %v1656 = vadd.f32 %v226, %v1655
    %1657 = vmatprep.mubr.bf16.mxu0 0
    %1658 = vmatmul.mubr.bf16.gmra.mrb[0].mxu0 %v314
    %v1659 = vpop.f32.mrb[0].mxu0
    %v1660 = vadd.f32 %v222, %v1659
    %v1661 = vpop.f32.mrb[0].mxu0
    %v1662 = vadd.f32 %v226, %v1661
    %v1663 = vpop.f32.mrb[0].mxu0
    %v1664 = vadd.f32 %v222, %v1663
    %v1665 = vpop.f32.mrb[0].mxu0
    %v1666 = vadd.f32 %v226, %v1665
    %1667 = vmatprep.mubr.bf16.mxu0 0
    %1668 = vmatmul.mubr.bf16.gmra.mrb[0].mxu0 %v315
    %v1669 = vpop.f32.mrb[0].mxu0
    %v1670 = vadd.f32 %v222, %v1669
    %v1671 = vpop.f32.mrb[0].mxu0
    %v1672 = vadd.f32 %v226, %v1671
    %v1673 = vpop.f32.mrb[0].mxu0
    %v1674 = vadd.f32 %v222, %v1673
    %v1675 = vpop.f32.mrb[0].mxu0
    %v1676 = vadd.f32 %v226, %v1675
    %1677 = vmatprep.mubr.bf16.mxu0 0
    %1678 = vmatmul.mubr.bf16.gmra.mrb[0].mxu0 %v316
    %v1679 = vpop.f32.mrb[0].mxu0
    %v1680 = vadd.f32 %v222, %v1679
    %v1681 = vpop.f32.mrb[0].mxu0
    %v1682 = vadd.f32 %v226, %v1681
    %v1683 = vpop.f32.mrb[0].mxu0
    %v1684 = vadd.f32 %v222, %v1683
    %v1685 = vpop.f32.mrb[0].mxu0
    %v1686 = vadd.f32 %v226, %v1685
    %1687 = vmatprep.mubr.bf16.mxu0 0
    %1688 = vmatmul.mubr.bf16.gmra.mrb[0].mxu0 %v317
    %v1689 = vpop.f32.mrb[0].mxu0
    %v1690 = vadd.f32 %v222, %v1689
    %v1691 = vpop.f32.mrb[0].mxu0
    %v1692 = vadd.f32 %v226, %v1691
    %v1693 = vpop.f32.mrb[0].mxu0
    %v1694 = vadd.f32 %v222, %v1693
    %v1695 = vpop.f32.mrb[0].mxu0
    %v1696 = vadd.f32 %v226, %v1695
    %1697 = vmatprep.mubr.bf16.mxu0 0
    %1698 = vmatmul.mubr.bf16.gmra.mrb[0].mxu0 %v318
    %v1699 = vpop.f32.mrb[0].mxu0
    %v1700 = vadd.f32 %v222, %v1699
    %v1701 = vpop.f32.mrb[0].mxu0
    %v1702 = vadd.f32 %v226, %v1701
    %v1703 = vpop.f32.mrb[0].mxu0
    %v1704 = vadd.f32 %v222, %v1703
    %v1705 = vpop.f32.mrb[0].mxu0
    %v1706 = vadd.f32 %v226, %v1705
    %1707 = vmatprep.mubr.bf16.mxu0 0
    %1708 = vmatmul.mubr.bf16.gmra.mrb[0].mxu0 %v319
    %v1709 = vpop.f32.mrb[0].mxu0
    %v1710 = vadd.f32 %v222, %v1709
    %v1711 = vpop.f32.mrb[0].mxu0
    %v1712 = vadd.f32 %v226, %v1711
    %v1713 = vpop.f32.mrb[0].mxu0
    %v1714 = vadd.f32 %v222, %v1713
    %v1715 = vpop.f32.mrb[0].mxu0
    %v1716 = vadd.f32 %v226, %v1715
    %1717 = vmatprep.mubr.bf16.mxu0 0
    %1718 = vmatmul.mubr.bf16.gmra.mrb[0].mxu0 %v320
    %v1719 = vpop.f32.mrb[0].mxu0
    %v1720 = vadd.f32 %v222, %v1719
    %v1721 = vpop.f32.mrb[0].mxu0
    %v1722 = vadd.f32 %v226, %v1721
    %v1723 = vpop.f32.mrb[0].mxu0
    %v1724 = vadd.f32 %v222, %v1723
    %v1725 = vpop.f32.mrb[0].mxu0
    %v1726 = vadd.f32 %v226, %v1725
    %1727 = vmatprep.mubr.bf16.mxu0 0
    %1728 = vmatmul.mubr.bf16.gmra.mrb[0].mxu0 %v321
    %v1729 = vpop.f32.mrb[0].mxu0
    %v1730 = vadd.f32 %v222, %v1729
    %v1731 = vpop.f32.mrb[0].mxu0
    %v1732 = vadd.f32 %v226, %v1731
    %v1733 = vpop.f32.mrb[0].mxu0
    %v1734 = vadd.f32 %v222, %v1733
    %v1735 = vpop.f32.mrb[0].mxu0
    %v1736 = vadd.f32 %v226, %v1735
    %1737 = vmatprep.mubr.bf16.mxu0 0
    %1738 = vmatmul.mubr.bf16.gmra.mrb[0].mxu0 %v322
    %v1739 = vpop.f32.mrb[0].mxu0
    %v1740 = vadd.f32 %v222, %v1739
    %v1741 = vpop.f32.mrb[0].mxu0
    %v1742 = vadd.f32 %v226, %v1741
    %v1743 = vpop.f32.mrb[0].mxu0
    %v1744 = vadd.f32 %v222, %v1743
    %v1745 = vpop.f32.mrb[0].mxu0
    %v1746 = vadd.f32 %v226, %v1745
    %1747 = vmatprep.mubr.bf16.mxu0 0
    %1748 = vmatmul.mubr.bf16.gmra.mrb[0].mxu0 %v323
    %v1749 = vpop.f32.mrb[0].mxu0
    %v1750 = vadd.f32 %v222, %v1749
    %v1751 = vpop.f32.mrb[0].mxu0
    %v1752 = vadd.f32 %v226, %v1751
    %v1753 = vpop.f32.mrb[0].mxu0
    %v1754 = vadd.f32 %v222, %v1753
    %v1755 = vpop.f32.mrb[0].mxu0
    %v1756 = vadd.f32 %v226, %v1755
    %1757 = vmatprep.mubr.bf16.mxu0 0
    %1758 = vmatmul.mubr.bf16.gmra.mrb[0].mxu0 %v324
    %v1759 = vpop.f32.mrb[0].mxu0
    %v1760 = vadd.f32 %v222, %v1759
    %v1761 = vpop.f32.mrb[0].mxu0
    %v1762 = vadd.f32 %v226, %v1761
    %v1763 = vpop.f32.mrb[0].mxu0
    %v1764 = vadd.f32 %v222, %v1763
    %v1765 = vpop.f32.mrb[0].mxu0
    %v1766 = vadd.f32 %v226, %v1765
    %1767 = vmatprep.mubr.bf16.mxu0 0
    %1768 = vmatmul.mubr.bf16.gmra.mrb[0].mxu0 %v325
    %v1769 = vpop.f32.mrb[0].mxu0
    %v1770 = vadd.f32 %v222, %v1769
    %v1771 = vpop.f32.mrb[0].mxu0
    %v1772 = vadd.f32 %v226, %v1771
    %v1773 = vpop.f32.mrb[0].mxu0
    %v1774 = vadd.f32 %v222, %v1773
    %v1775 = vpop.f32.mrb[0].mxu0
    %v1776 = vadd.f32 %v226, %v1775
    %1777 = vmatprep.mubr.bf16.mxu0 0
    %1778 = vmatmul.mubr.bf16.gmra.mrb[0].mxu0 %v326
    %v1779 = vpop.f32.mrb[0].mxu0
    %v1780 = vadd.f32 %v222, %v1779
    %v1781 = vpop.f32.mrb[0].mxu0
    %v1782 = vadd.f32 %v226, %v1781
    %v1783 = vpop.f32.mrb[0].mxu0
    %v1784 = vadd.f32 %v222, %v1783
    %v1785 = vpop.f32.mrb[0].mxu0
    %v1786 = vadd.f32 %v226, %v1785
    %1787 = vdwg.mxu0
    %1788 = vmatprep.subr.bf16.mxu0 %v642
    %1789 = vmatpush1.bf16.msra.mxu0 %v641
    %1790 = vmatprep.subr.bf16.mxu0 %v654
    %1791 = vmatpush1.bf16.msra.mxu0 %v653
    %1792 = vmatprep.subr.bf16.mxu0 %v666
    %1793 = vmatpush1.bf16.msra.mxu0 %v665
    %1794 = vmatprep.subr.bf16.mxu0 %v678
    %1795 = vmatpush1.bf16.msra.mxu0 %v677
    %1796 = vmatprep.subr.bf16.mxu0 %v690
    %1797 = vmatpush1.bf16.msra.mxu0 %v689
    %1798 = vmatprep.subr.bf16.mxu0 %v702
    %1799 = vmatpush1.bf16.msra.mxu0 %v701
    %1800 = vmatprep.subr.bf16.mxu0 %v714
    %1801 = vmatpush1.bf16.msra.mxu0 %v713
    %1802 = vmatprep.subr.bf16.mxu0 %v726
    %1803 = vmatpush1.bf16.msra.mxu0 %v725
    %1804 = vmatprep.subr.bf16.mxu0 0
    %1805 = vmatpush1.bf16.msra.mxu0 0
    %1806 = vmatprep.subr.bf16.mxu0 0
    %1807 = vmatpush1.bf16.msra.mxu0 0
    %1808 = vmatprep.subr.bf16.mxu0 0
    %1809 = vmatpush1.bf16.msra.mxu0 0
    %1810 = vmatprep.subr.bf16.mxu0 0
    %1811 = vmatpush1.bf16.msra.mxu0 0
    %1812 = vmatprep.subr.bf16.mxu0 0
    %1813 = vmatpush1.bf16.msra.mxu0 0
    %1814 = vmatprep.subr.bf16.mxu0 0
    %1815 = vmatpush1.bf16.msra.mxu0 0
    %1816 = vmatprep.subr.bf16.mxu0 0
    %1817 = vmatpush1.bf16.msra.mxu0 0
    %1818 = vmatprep.subr.bf16.mxu0 0
    %1819 = vmatpush1.bf16.msra.mxu0 0
    %1820 = vmatprep.mubr.bf16.mxu0 0
    %1821 = vmatmul.mubr.bf16.gmra.mrb[0].mxu0 %v311
    %v1822 = vpop.f32.mrb[0].mxu0
    %v1823 = vadd.f32 %v230, %v1822
    %v1824 = vpop.f32.mrb[0].mxu0
    %v1825 = vadd.f32 %v234, %v1824
    %v1826 = vpop.f32.mrb[0].mxu0
    %v1827 = vadd.f32 %v230, %v1826
    %v1828 = vpop.f32.mrb[0].mxu0
    %v1829 = vadd.f32 %v234, %v1828
    %1830 = vmatprep.mubr.bf16.mxu0 0
    %1831 = vmatmul.mubr.bf16.gmra.mrb[0].mxu0 %v312
    %v1832 = vpop.f32.mrb[0].mxu0
    %v1833 = vadd.f32 %v230, %v1832
    %v1834 = vpop.f32.mrb[0].mxu0
    %v1835 = vadd.f32 %v234, %v1834
    %v1836 = vpop.f32.mrb[0].mxu0
    %v1837 = vadd.f32 %v230, %v1836
    %v1838 = vpop.f32.mrb[0].mxu0
    %v1839 = vadd.f32 %v234, %v1838
    %1840 = vmatprep.mubr.bf16.mxu0 0
    %1841 = vmatmul.mubr.bf16.gmra.mrb[0].mxu0 %v313
    %v1842 = vpop.f32.mrb[0].mxu0
    %v1843 = vadd.f32 %v230, %v1842
    %v1844 = vpop.f32.mrb[0].mxu0
    %v1845 = vadd.f32 %v234, %v1844
    %v1846 = vpop.f32.mrb[0].mxu0
    %v1847 = vadd.f32 %v230, %v1846
    %v1848 = vpop.f32.mrb[0].mxu0
    %v1849 = vadd.f32 %v234, %v1848
    %1850 = vmatprep.mubr.bf16.mxu0 0
    %1851 = vmatmul.mubr.bf16.gmra.mrb[0].mxu0 %v314
    %v1852 = vpop.f32.mrb[0].mxu0
    %v1853 = vadd.f32 %v230, %v1852
    %v1854 = vpop.f32.mrb[0].mxu0
    %v1855 = vadd.f32 %v234, %v1854
    %v1856 = vpop.f32.mrb[0].mxu0
    %v1857 = vadd.f32 %v230, %v1856
    %v1858 = vpop.f32.mrb[0].mxu0
    %v1859 = vadd.f32 %v234, %v1858
    %1860 = vmatprep.mubr.bf16.mxu0 0
    %1861 = vmatmul.mubr.bf16.gmra.mrb[0].mxu0 %v315
    %v1862 = vpop.f32.mrb[0].mxu0
    %v1863 = vadd.f32 %v230, %v1862
    %v1864 = vpop.f32.mrb[0].mxu0
    %v1865 = vadd.f32 %v234, %v1864
    %v1866 = vpop.f32.mrb[0].mxu0
    %v1867 = vadd.f32 %v230, %v1866
    %v1868 = vpop.f32.mrb[0].mxu0
    %v1869 = vadd.f32 %v234, %v1868
    %1870 = vmatprep.mubr.bf16.mxu0 0
    %1871 = vmatmul.mubr.bf16.gmra.mrb[0].mxu0 %v316
    %v1872 = vpop.f32.mrb[0].mxu0
    %v1873 = vadd.f32 %v230, %v1872
    %v1874 = vpop.f32.mrb[0].mxu0
    %v1875 = vadd.f32 %v234, %v1874
    %v1876 = vpop.f32.mrb[0].mxu0
    %v1877 = vadd.f32 %v230, %v1876
    %v1878 = vpop.f32.mrb[0].mxu0
    %v1879 = vadd.f32 %v234, %v1878
    %1880 = vmatprep.mubr.bf16.mxu0 0
    %1881 = vmatmul.mubr.bf16.gmra.mrb[0].mxu0 %v317
    %v1882 = vpop.f32.mrb[0].mxu0
    %v1883 = vadd.f32 %v230, %v1882
    %v1884 = vpop.f32.mrb[0].mxu0
    %v1885 = vadd.f32 %v234, %v1884
    %v1886 = vpop.f32.mrb[0].mxu0
    %v1887 = vadd.f32 %v230, %v1886
    %v1888 = vpop.f32.mrb[0].mxu0
    %v1889 = vadd.f32 %v234, %v1888
    %1890 = vmatprep.mubr.bf16.mxu0 0
    %1891 = vmatmul.mubr.bf16.gmra.mrb[0].mxu0 %v318
    %v1892 = vpop.f32.mrb[0].mxu0
    %v1893 = vadd.f32 %v230, %v1892
    %v1894 = vpop.f32.mrb[0].mxu0
    %v1895 = vadd.f32 %v234, %v1894
    %v1896 = vpop.f32.mrb[0].mxu0
    %v1897 = vadd.f32 %v230, %v1896
    %v1898 = vpop.f32.mrb[0].mxu0
    %v1899 = vadd.f32 %v234, %v1898
    %1900 = vmatprep.mubr.bf16.mxu0 0
    %1901 = vmatmul.mubr.bf16.gmra.mrb[0].mxu0 %v319
    %v1902 = vpop.f32.mrb[0].mxu0
    %v1903 = vadd.f32 %v230, %v1902
    %v1904 = vpop.f32.mrb[0].mxu0
    %v1905 = vadd.f32 %v234, %v1904
    %v1906 = vpop.f32.mrb[0].mxu0
    %v1907 = vadd.f32 %v230, %v1906
    %v1908 = vpop.f32.mrb[0].mxu0
    %v1909 = vadd.f32 %v234, %v1908
    %1910 = vmatprep.mubr.bf16.mxu0 0
    %1911 = vmatmul.mubr.bf16.gmra.mrb[0].mxu0 %v320
    %v1912 = vpop.f32.mrb[0].mxu0
    %v1913 = vadd.f32 %v230, %v1912
    %v1914 = vpop.f32.mrb[0].mxu0
    %v1915 = vadd.f32 %v234, %v1914
    %v1916 = vpop.f32.mrb[0].mxu0
    %v1917 = vadd.f32 %v230, %v1916
    %v1918 = vpop.f32.mrb[0].mxu0
    %v1919 = vadd.f32 %v234, %v1918
    %1920 = vmatprep.mubr.bf16.mxu0 0
    %1921 = vmatmul.mubr.bf16.gmra.mrb[0].mxu0 %v321
    %v1922 = vpop.f32.mrb[0].mxu0
    %v1923 = vadd.f32 %v230, %v1922
    %v1924 = vpop.f32.mrb[0].mxu0
    %v1925 = vadd.f32 %v234, %v1924
    %v1926 = vpop.f32.mrb[0].mxu0
    %v1927 = vadd.f32 %v230, %v1926
    %v1928 = vpop.f32.mrb[0].mxu0
    %v1929 = vadd.f32 %v234, %v1928
    %1930 = vmatprep.mubr.bf16.mxu0 0
    %1931 = vmatmul.mubr.bf16.gmra.mrb[0].mxu0 %v322
    %v1932 = vpop.f32.mrb[0].mxu0
    %v1933 = vadd.f32 %v230, %v1932
    %v1934 = vpop.f32.mrb[0].mxu0
    %v1935 = vadd.f32 %v234, %v1934
    %v1936 = vpop.f32.mrb[0].mxu0
    %v1937 = vadd.f32 %v230, %v1936
    %v1938 = vpop.f32.mrb[0].mxu0
    %v1939 = vadd.f32 %v234, %v1938
    %1940 = vmatprep.mubr.bf16.mxu0 0
    %1941 = vmatmul.mubr.bf16.gmra.mrb[0].mxu0 %v323
    %v1942 = vpop.f32.mrb[0].mxu0
    %v1943 = vadd.f32 %v230, %v1942
    %v1944 = vpop.f32.mrb[0].mxu0
    %v1945 = vadd.f32 %v234, %v1944
    %v1946 = vpop.f32.mrb[0].mxu0
    %v1947 = vadd.f32 %v230, %v1946
    %v1948 = vpop.f32.mrb[0].mxu0
    %v1949 = vadd.f32 %v234, %v1948
    %1950 = vmatprep.mubr.bf16.mxu0 0
    %1951 = vmatmul.mubr.bf16.gmra.mrb[0].mxu0 %v324
    %v1952 = vpop.f32.mrb[0].mxu0
    %v1953 = vadd.f32 %v230, %v1952
    %v1954 = vpop.f32.mrb[0].mxu0
    %v1955 = vadd.f32 %v234, %v1954
    %v1956 = vpop.f32.mrb[0].mxu0
    %v1957 = vadd.f32 %v230, %v1956
    %v1958 = vpop.f32.mrb[0].mxu0
    %v1959 = vadd.f32 %v234, %v1958
    %1960 = vmatprep.mubr.bf16.mxu0 0
    %1961 = vmatmul.mubr.bf16.gmra.mrb[0].mxu0 %v325
    %v1962 = vpop.f32.mrb[0].mxu0
    %v1963 = vadd.f32 %v230, %v1962
    %v1964 = vpop.f32.mrb[0].mxu0
    %v1965 = vadd.f32 %v234, %v1964
    %v1966 = vpop.f32.mrb[0].mxu0
    %v1967 = vadd.f32 %v230, %v1966
    %v1968 = vpop.f32.mrb[0].mxu0
    %v1969 = vadd.f32 %v234, %v1968
    %1970 = vmatprep.mubr.bf16.mxu0 0
    %1971 = vmatmul.mubr.bf16.gmra.mrb[0].mxu0 %v326
    %v1972 = vpop.f32.mrb[0].mxu0
    %v1973 = vadd.f32 %v230, %v1972
    %v1974 = vpop.f32.mrb[0].mxu0
    %v1975 = vadd.f32 %v234, %v1974
    %v1976 = vpop.f32.mrb[0].mxu0
    %v1977 = vadd.f32 %v230, %v1976
    %v1978 = vpop.f32.mrb[0].mxu0
    %v1979 = vadd.f32 %v234, %v1978
    %1980 = vdwg.mxu0
    %v1981 = vmax.f32 %v858, %v1051
    %v1982 = vmax.f32 %v860, %v1053
    %v1983 = vmax.f32 %v862, %v1055
    %v1984 = vmax.f32 %v864, %v1057
    %v1985 = vmax.f32 %v868, %v1061
    %v1986 = vmax.f32 %v870, %v1063
    %v1987 = vmax.f32 %v872, %v1065
    %v1988 = vmax.f32 %v874, %v1067
    %v1989 = vmax.f32 %v878, %v1071
    %v1990 = vmax.f32 %v880, %v1073
    %v1991 = vmax.f32 %v882, %v1075
    %v1992 = vmax.f32 %v884, %v1077
    %v1993 = vmax.f32 %v888, %v1081
    %v1994 = vmax.f32 %v890, %v1083
    %v1995 = vmax.f32 %v892, %v1085
    %v1996 = vmax.f32 %v894, %v1087
    %v1997 = vmax.f32 %v898, %v1091
    %v1998 = vmax.f32 %v900, %v1093
    %v1999 = vmax.f32 %v902, %v1095
    %v2000 = vmax.f32 %v904, %v1097
    %v2001 = vmax.f32 %v908, %v1101
    %v2002 = vmax.f32 %v910, %v1103
    %v2003 = vmax.f32 %v912, %v1105
    %v2004 = vmax.f32 %v914, %v1107
    %v2005 = vmax.f32 %v918, %v1111
    %v2006 = vmax.f32 %v920, %v1113
    %v2007 = vmax.f32 %v922, %v1115
    %v2008 = vmax.f32 %v924, %v1117
    %v2009 = vmax.f32 %v928, %v1121
    %v2010 = vmax.f32 %v930, %v1123
    %v2011 = vmax.f32 %v932, %v1125
    %v2012 = vmax.f32 %v934, %v1127
    %v2013 = vmax.f32 %v938, %v1131
    %v2014 = vmax.f32 %v940, %v1133
    %v2015 = vmax.f32 %v942, %v1135
    %v2016 = vmax.f32 %v944, %v1137
    %v2017 = vmax.f32 %v948, %v1141
    %v2018 = vmax.f32 %v950, %v1143
    %v2019 = vmax.f32 %v952, %v1145
    %v2020 = vmax.f32 %v954, %v1147
    %v2021 = vmax.f32 %v958, %v1151
    %v2022 = vmax.f32 %v960, %v1153
    %v2023 = vmax.f32 %v962, %v1155
    %v2024 = vmax.f32 %v964, %v1157
    %v2025 = vmax.f32 %v968, %v1161
    %v2026 = vmax.f32 %v970, %v1163
    %v2027 = vmax.f32 %v972, %v1165
    %v2028 = vmax.f32 %v974, %v1167
    %v2029 = vmax.f32 %v978, %v1171
    %v2030 = vmax.f32 %v980, %v1173
    %v2031 = vmax.f32 %v982, %v1175
    %v2032 = vmax.f32 %v984, %v1177
    %v2033 = vmax.f32 %v988, %v1181
    %v2034 = vmax.f32 %v990, %v1183
    %v2035 = vmax.f32 %v992, %v1185
    %v2036 = vmax.f32 %v994, %v1187
    %v2037 = vmax.f32 %v998, %v1191
    %v2038 = vmax.f32 %v1000, %v1193
    %v2039 = vmax.f32 %v1002, %v1195
    %v2040 = vmax.f32 %v1004, %v1197
    %v2041 = vmax.f32 %v1008, %v1201
    %v2042 = vmax.f32 %v1010, %v1203
    %v2043 = vmax.f32 %v1012, %v1205
    %v2044 = vmax.f32 %v1014, %v1207
    %v2045 = vmax.f32 %v1981, %v1244
    %v2046 = vmax.f32 %v1982, %v1246
    %v2047 = vmax.f32 %v1983, %v1248
    %v2048 = vmax.f32 %v1984, %v1250
    %v2049 = vmax.f32 %v1985, %v1254
    %v2050 = vmax.f32 %v1986, %v1256
    %v2051 = vmax.f32 %v1987, %v1258
    %v2052 = vmax.f32 %v1988, %v1260
    %v2053 = vmax.f32 %v1989, %v1264
    %v2054 = vmax.f32 %v1990, %v1266
    %v2055 = vmax.f32 %v1991, %v1268
    %v2056 = vmax.f32 %v1992, %v1270
    %v2057 = vmax.f32 %v1993, %v1274
    %v2058 = vmax.f32 %v1994, %v1276
    %v2059 = vmax.f32 %v1995, %v1278
    %v2060 = vmax.f32 %v1996, %v1280
    %v2061 = vmax.f32 %v1997, %v1284
    %v2062 = vmax.f32 %v1998, %v1286
    %v2063 = vmax.f32 %v1999, %v1288
    %v2064 = vmax.f32 %v2000, %v1290
    %v2065 = vmax.f32 %v2001, %v1294
    %v2066 = vmax.f32 %v2002, %v1296
    %v2067 = vmax.f32 %v2003, %v1298
    %v2068 = vmax.f32 %v2004, %v1300
    %v2069 = vmax.f32 %v2005, %v1304
    %v2070 = vmax.f32 %v2006, %v1306
    %v2071 = vmax.f32 %v2007, %v1308
    %v2072 = vmax.f32 %v2008, %v1310
    %v2073 = vmax.f32 %v2009, %v1314
    %v2074 = vmax.f32 %v2010, %v1316
    %v2075 = vmax.f32 %v2011, %v1318
    %v2076 = vmax.f32 %v2012, %v1320
    %v2077 = vmax.f32 %v2013, %v1324
    %v2078 = vmax.f32 %v2014, %v1326
    %v2079 = vmax.f32 %v2015, %v1328
    %v2080 = vmax.f32 %v2016, %v1330
    %v2081 = vmax.f32 %v2017, %v1334
    %v2082 = vmax.f32 %v2018, %v1336
    %v2083 = vmax.f32 %v2019, %v1338
    %v2084 = vmax.f32 %v2020, %v1340
    %v2085 = vmax.f32 %v2021, %v1344
    %v2086 = vmax.f32 %v2022, %v1346
    %v2087 = vmax.f32 %v2023, %v1348
    %v2088 = vmax.f32 %v2024, %v1350
    %v2089 = vmax.f32 %v2025, %v1354
    %v2090 = vmax.f32 %v2026, %v1356
    %v2091 = vmax.f32 %v2027, %v1358
    %v2092 = vmax.f32 %v2028, %v1360
    %v2093 = vmax.f32 %v2029, %v1364
    %v2094 = vmax.f32 %v2030, %v1366
    %v2095 = vmax.f32 %v2031, %v1368
    %v2096 = vmax.f32 %v2032, %v1370
    %v2097 = vmax.f32 %v2033, %v1374
    %v2098 = vmax.f32 %v2034, %v1376
    %v2099 = vmax.f32 %v2035, %v1378
    %v2100 = vmax.f32 %v2036, %v1380
    %v2101 = vmax.f32 %v2037, %v1384
    %v2102 = vmax.f32 %v2038, %v1386
    %v2103 = vmax.f32 %v2039, %v1388
    %v2104 = vmax.f32 %v2040, %v1390
    %v2105 = vmax.f32 %v2041, %v1394
    %v2106 = vmax.f32 %v2042, %v1396
    %v2107 = vmax.f32 %v2043, %v1398
    %v2108 = vmax.f32 %v2044, %v1400
    %v2109 = vmax.f32 %v2045, %v1437
    %v2110 = vmax.f32 %v2046, %v1439
    %v2111 = vmax.f32 %v2047, %v1441
    %v2112 = vmax.f32 %v2048, %v1443
    %v2113 = vmax.f32 %v2049, %v1447
    %v2114 = vmax.f32 %v2050, %v1449
    %v2115 = vmax.f32 %v2051, %v1451
    %v2116 = vmax.f32 %v2052, %v1453
    %v2117 = vmax.f32 %v2053, %v1457
    %v2118 = vmax.f32 %v2054, %v1459
    %v2119 = vmax.f32 %v2055, %v1461
    %v2120 = vmax.f32 %v2056, %v1463
    %v2121 = vmax.f32 %v2057, %v1467
    %v2122 = vmax.f32 %v2058, %v1469
    %v2123 = vmax.f32 %v2059, %v1471
    %v2124 = vmax.f32 %v2060, %v1473
    %v2125 = vmax.f32 %v2061, %v1477
    %v2126 = vmax.f32 %v2062, %v1479
    %v2127 = vmax.f32 %v2063, %v1481
    %v2128 = vmax.f32 %v2064, %v1483
    %v2129 = vmax.f32 %v2065, %v1487
    %v2130 = vmax.f32 %v2066, %v1489
    %v2131 = vmax.f32 %v2067, %v1491
    %v2132 = vmax.f32 %v2068, %v1493
    %v2133 = vmax.f32 %v2069, %v1497
    %v2134 = vmax.f32 %v2070, %v1499
    %v2135 = vmax.f32 %v2071, %v1501
    %v2136 = vmax.f32 %v2072, %v1503
    %v2137 = vmax.f32 %v2073, %v1507
    %v2138 = vmax.f32 %v2074, %v1509
    %v2139 = vmax.f32 %v2075, %v1511
    %v2140 = vmax.f32 %v2076, %v1513
    %v2141 = vmax.f32 %v2077, %v1517
    %v2142 = vmax.f32 %v2078, %v1519
    %v2143 = vmax.f32 %v2079, %v1521
    %v2144 = vmax.f32 %v2080, %v1523
    %v2145 = vmax.f32 %v2081, %v1527
    %v2146 = vmax.f32 %v2082, %v1529
    %v2147 = vmax.f32 %v2083, %v1531
    %v2148 = vmax.f32 %v2084, %v1533
    %v2149 = vmax.f32 %v2085, %v1537
    %v2150 = vmax.f32 %v2086, %v1539
    %v2151 = vmax.f32 %v2087, %v1541
    %v2152 = vmax.f32 %v2088, %v1543
    %v2153 = vmax.f32 %v2089, %v1547
    %v2154 = vmax.f32 %v2090, %v1549
    %v2155 = vmax.f32 %v2091, %v1551
    %v2156 = vmax.f32 %v2092, %v1553
    %v2157 = vmax.f32 %v2093, %v1557
    %v2158 = vmax.f32 %v2094, %v1559
    %v2159 = vmax.f32 %v2095, %v1561
    %v2160 = vmax.f32 %v2096, %v1563
    %v2161 = vmax.f32 %v2097, %v1567
    %v2162 = vmax.f32 %v2098, %v1569
    %v2163 = vmax.f32 %v2099, %v1571
    %v2164 = vmax.f32 %v2100, %v1573
    %v2165 = vmax.f32 %v2101, %v1577
    %v2166 = vmax.f32 %v2102, %v1579
    %v2167 = vmax.f32 %v2103, %v1581
    %v2168 = vmax.f32 %v2104, %v1583
    %v2169 = vmax.f32 %v2105, %v1587
    %v2170 = vmax.f32 %v2106, %v1589
    %v2171 = vmax.f32 %v2107, %v1591
    %v2172 = vmax.f32 %v2108, %v1593
    %v2173 = vmax.f32 %v2109, %v1630
    %v2174 = vmax.f32 %v2110, %v1632
    %v2175 = vmax.f32 %v2111, %v1634
    %v2176 = vmax.f32 %v2112, %v1636
    %v2177 = vmax.f32 %v2113, %v1640
    %v2178 = vmax.f32 %v2114, %v1642
    %v2179 = vmax.f32 %v2115, %v1644
    %v2180 = vmax.f32 %v2116, %v1646
    %v2181 = vmax.f32 %v2117, %v1650
    %v2182 = vmax.f32 %v2118, %v1652
    %v2183 = vmax.f32 %v2119, %v1654
    %v2184 = vmax.f32 %v2120, %v1656
    %v2185 = vmax.f32 %v2121, %v1660
    %v2186 = vmax.f32 %v2122, %v1662
    %v2187 = vmax.f32 %v2123, %v1664
    %v2188 = vmax.f32 %v2124, %v1666
    %v2189 = vmax.f32 %v2125, %v1670
    %v2190 = vmax.f32 %v2126, %v1672
    %v2191 = vmax.f32 %v2127, %v1674
    %v2192 = vmax.f32 %v2128, %v1676
    %v2193 = vmax.f32 %v2129, %v1680
    %v2194 = vmax.f32 %v2130, %v1682
    %v2195 = vmax.f32 %v2131, %v1684
    %v2196 = vmax.f32 %v2132, %v1686
    %v2197 = vmax.f32 %v2133, %v1690
    %v2198 = vmax.f32 %v2134, %v1692
    %v2199 = vmax.f32 %v2135, %v1694
    %v2200 = vmax.f32 %v2136, %v1696
    %v2201 = vmax.f32 %v2137, %v1700
    %v2202 = vmax.f32 %v2138, %v1702
    %v2203 = vmax.f32 %v2139, %v1704
    %v2204 = vmax.f32 %v2140, %v1706
    %v2205 = vmax.f32 %v2141, %v1710
    %v2206 = vmax.f32 %v2142, %v1712
    %v2207 = vmax.f32 %v2143, %v1714
    %v2208 = vmax.f32 %v2144, %v1716
    %v2209 = vmax.f32 %v2145, %v1720
    %v2210 = vmax.f32 %v2146, %v1722
    %v2211 = vmax.f32 %v2147, %v1724
    %v2212 = vmax.f32 %v2148, %v1726
    %v2213 = vmax.f32 %v2149, %v1730
    %v2214 = vmax.f32 %v2150, %v1732
    %v2215 = vmax.f32 %v2151, %v1734
    %v2216 = vmax.f32 %v2152, %v1736
    %v2217 = vmax.f32 %v2153, %v1740
    %v2218 = vmax.f32 %v2154, %v1742
    %v2219 = vmax.f32 %v2155, %v1744
    %v2220 = vmax.f32 %v2156, %v1746
    %v2221 = vmax.f32 %v2157, %v1750
    %v2222 = vmax.f32 %v2158, %v1752
    %v2223 = vmax.f32 %v2159, %v1754
    %v2224 = vmax.f32 %v2160, %v1756
    %v2225 = vmax.f32 %v2161, %v1760
    %v2226 = vmax.f32 %v2162, %v1762
    %v2227 = vmax.f32 %v2163, %v1764
    %v2228 = vmax.f32 %v2164, %v1766
    %v2229 = vmax.f32 %v2165, %v1770
    %v2230 = vmax.f32 %v2166, %v1772
    %v2231 = vmax.f32 %v2167, %v1774
    %v2232 = vmax.f32 %v2168, %v1776
    %v2233 = vmax.f32 %v2169, %v1780
    %v2234 = vmax.f32 %v2170, %v1782
    %v2235 = vmax.f32 %v2171, %v1784
    %v2236 = vmax.f32 %v2172, %v1786
    %v2237 = vmax.f32 %v2173, %v1823
    %v2238 = vmax.f32 %v2174, %v1825
    %v2239 = vmax.f32 %v2175, %v1827
    %v2240 = vmax.f32 %v2176, %v1829
    %v2241 = vmax.f32 %v2177, %v1833
    %v2242 = vmax.f32 %v2178, %v1835
    %v2243 = vmax.f32 %v2179, %v1837
    %v2244 = vmax.f32 %v2180, %v1839
    %v2245 = vmax.f32 %v2181, %v1843
    %v2246 = vmax.f32 %v2182, %v1845
    %v2247 = vmax.f32 %v2183, %v1847
    %v2248 = vmax.f32 %v2184, %v1849
    %v2249 = vmax.f32 %v2185, %v1853
    %v2250 = vmax.f32 %v2186, %v1855
    %v2251 = vmax.f32 %v2187, %v1857
    %v2252 = vmax.f32 %v2188, %v1859
    %v2253 = vmax.f32 %v2189, %v1863
    %v2254 = vmax.f32 %v2190, %v1865
    %v2255 = vmax.f32 %v2191, %v1867
    %v2256 = vmax.f32 %v2192, %v1869
    %v2257 = vmax.f32 %v2193, %v1873
    %v2258 = vmax.f32 %v2194, %v1875
    %v2259 = vmax.f32 %v2195, %v1877
    %v2260 = vmax.f32 %v2196, %v1879
    %v2261 = vmax.f32 %v2197, %v1883
    %v2262 = vmax.f32 %v2198, %v1885
    %v2263 = vmax.f32 %v2199, %v1887
    %v2264 = vmax.f32 %v2200, %v1889
    %v2265 = vmax.f32 %v2201, %v1893
    %v2266 = vmax.f32 %v2202, %v1895
    %v2267 = vmax.f32 %v2203, %v1897
    %v2268 = vmax.f32 %v2204, %v1899
    %v2269 = vmax.f32 %v2205, %v1903
    %v2270 = vmax.f32 %v2206, %v1905
    %v2271 = vmax.f32 %v2207, %v1907
    %v2272 = vmax.f32 %v2208, %v1909
    %v2273 = vmax.f32 %v2209, %v1913
    %v2274 = vmax.f32 %v2210, %v1915
    %v2275 = vmax.f32 %v2211, %v1917
    %v2276 = vmax.f32 %v2212, %v1919
    %v2277 = vmax.f32 %v2213, %v1923
    %v2278 = vmax.f32 %v2214, %v1925
    %v2279 = vmax.f32 %v2215, %v1927
    %v2280 = vmax.f32 %v2216, %v1929
    %v2281 = vmax.f32 %v2217, %v1933
    %v2282 = vmax.f32 %v2218, %v1935
    %v2283 = vmax.f32 %v2219, %v1937
    %v2284 = vmax.f32 %v2220, %v1939
    %v2285 = vmax.f32 %v2221, %v1943
    %v2286 = vmax.f32 %v2222, %v1945
    %v2287 = vmax.f32 %v2223, %v1947
    %v2288 = vmax.f32 %v2224, %v1949
    %v2289 = vmax.f32 %v2225, %v1953
    %v2290 = vmax.f32 %v2226, %v1955
    %v2291 = vmax.f32 %v2227, %v1957
    %v2292 = vmax.f32 %v2228, %v1959
    %v2293 = vmax.f32 %v2229, %v1963
    %v2294 = vmax.f32 %v2230, %v1965
    %v2295 = vmax.f32 %v2231, %v1967
    %v2296 = vmax.f32 %v2232, %v1969
    %v2297 = vmax.f32 %v2233, %v1973
    %v2298 = vmax.f32 %v2234, %v1975
    %v2299 = vmax.f32 %v2235, %v1977
    %v2300 = vmax.f32 %v2236, %v1979
    %v2301 = vmax.f32 %v2237, 0.0
    %v2302 = vmax.f32 %v2238, 0.0
    %v2303 = vmax.f32 %v2239, 0.0
    %v2304 = vmax.f32 %v2240, 0.0
    %v2305 = vmax.f32 %v2241, 0.0
    %v2306 = vmax.f32 %v2242, 0.0
    %v2307 = vmax.f32 %v2243, 0.0
    %v2308 = vmax.f32 %v2244, 0.0
    %v2309 = vmax.f32 %v2245, 0.0
    %v2310 = vmax.f32 %v2246, 0.0
    %v2311 = vmax.f32 %v2247, 0.0
    %v2312 = vmax.f32 %v2248, 0.0
    %v2313 = vmax.f32 %v2249, 0.0
    %v2314 = vmax.f32 %v2250, 0.0
    %v2315 = vmax.f32 %v2251, 0.0
    %v2316 = vmax.f32 %v2252, 0.0
    %v2317 = vmax.f32 %v2253, 0.0
    %v2318 = vmax.f32 %v2254, 0.0
    %v2319 = vmax.f32 %v2255, 0.0
    %v2320 = vmax.f32 %v2256, 0.0
    %v2321 = vmax.f32 %v2257, 0.0
    %v2322 = vmax.f32 %v2258, 0.0
    %v2323 = vmax.f32 %v2259, 0.0
    %v2324 = vmax.f32 %v2260, 0.0
    %v2325 = vmax.f32 %v2261, 0.0
    %v2326 = vmax.f32 %v2262, 0.0
    %v2327 = vmax.f32 %v2263, 0.0
    %v2328 = vmax.f32 %v2264, 0.0
    %v2329 = vmax.f32 %v2265, 0.0
    %v2330 = vmax.f32 %v2266, 0.0
    %v2331 = vmax.f32 %v2267, 0.0
    %v2332 = vmax.f32 %v2268, 0.0
    %v2333 = vmax.f32 %v2269, 0.0
    %v2334 = vmax.f32 %v2270, 0.0
    %v2335 = vmax.f32 %v2271, 0.0
    %v2336 = vmax.f32 %v2272, 0.0
    %v2337 = vmax.f32 %v2273, 0.0
    %v2338 = vmax.f32 %v2274, 0.0
    %v2339 = vmax.f32 %v2275, 0.0
    %v2340 = vmax.f32 %v2276, 0.0
    %v2341 = vmax.f32 %v2277, 0.0
    %v2342 = vmax.f32 %v2278, 0.0
    %v2343 = vmax.f32 %v2279, 0.0
    %v2344 = vmax.f32 %v2280, 0.0
    %v2345 = vmax.f32 %v2281, 0.0
    %v2346 = vmax.f32 %v2282, 0.0
    %v2347 = vmax.f32 %v2283, 0.0
    %v2348 = vmax.f32 %v2284, 0.0
    %v2349 = vmax.f32 %v2285, 0.0
    %v2350 = vmax.f32 %v2286, 0.0
    %v2351 = vmax.f32 %v2287, 0.0
    %v2352 = vmax.f32 %v2288, 0.0
    %v2353 = vmax.f32 %v2289, 0.0
    %v2354 = vmax.f32 %v2290, 0.0
    %v2355 = vmax.f32 %v2291, 0.0
    %v2356 = vmax.f32 %v2292, 0.0
    %v2357 = vmax.f32 %v2293, 0.0
    %v2358 = vmax.f32 %v2294, 0.0
    %v2359 = vmax.f32 %v2295, 0.0
    %v2360 = vmax.f32 %v2296, 0.0
    %v2361 = vmax.f32 %v2297, 0.0
    %v2362 = vmax.f32 %v2298, 0.0
    %v2363 = vmax.f32 %v2299, 0.0
    %v2364 = vmax.f32 %v2300, 0.0
    %2365 = vst [vmem:[#allocation8] sm:$0xff] %v2301
    %2366 = vst [vmem:[#allocation8 + $0x8] sm:$0xff] %v2302
    %2367 = vst [vmem:[#allocation8 + $0x10] sm:$0xff] %v2303
    %2368 = vst [vmem:[#allocation8 + $0x18] sm:$0xff] %v2304
    %2369 = vst [vmem:[#allocation8 + $0x20] sm:$0xff] %v2305
    %2370 = vst [vmem:[#allocation8 + $0x28] sm:$0xff] %v2306
    %2371 = vst [vmem:[#allocation8 + $0x30] sm:$0xff] %v2307
    %2372 = vst [vmem:[#allocation8 + $0x38] sm:$0xff] %v2308
    %2373 = vst [vmem:[#allocation8 + $0x40] sm:$0xff] %v2309
    %2374 = vst [vmem:[#allocation8 + $0x48] sm:$0xff] %v2310
    %2375 = vst [vmem:[#allocation8 + $0x50] sm:$0xff] %v2311
    %2376 = vst [vmem:[#allocation8 + $0x58] sm:$0xff] %v2312
    %2377 = vst [vmem:[#allocation8 + $0x60] sm:$0xff] %v2313
    %2378 = vst [vmem:[#allocation8 + $0x68] sm:$0xff] %v2314
    %2379 = vst [vmem:[#allocation8 + $0x70] sm:$0xff] %v2315
    %2380 = vst [vmem:[#allocation8 + $0x78] sm:$0xff] %v2316
    %2381 = vst [vmem:[#allocation8 + $0x80] sm:$0xff] %v2317
    %2382 = vst [vmem:[#allocation8 + $0x88] sm:$0xff] %v2318
    %2383 = vst [vmem:[#allocation8 + $0x90] sm:$0xff] %v2319
    %2384 = vst [vmem:[#allocation8 + $0x98] sm:$0xff] %v2320
    %2385 = vst [vmem:[#allocation8 + $0xa0] sm:$0xff] %v2321
    %2386 = vst [vmem:[#allocation8 + $0xa8] sm:$0xff] %v2322
    %2387 = vst [vmem:[#allocation8 + $0xb0] sm:$0xff] %v2323
    %2388 = vst [vmem:[#allocation8 + $0xb8] sm:$0xff] %v2324
    %2389 = vst [vmem:[#allocation8 + $0xc0] sm:$0xff] %v2325
    %2390 = vst [vmem:[#allocation8 + $0xc8] sm:$0xff] %v2326
    %2391 = vst [vmem:[#allocation8 + $0xd0] sm:$0xff] %v2327
    %2392 = vst [vmem:[#allocation8 + $0xd8] sm:$0xff] %v2328
    %2393 = vst [vmem:[#allocation8 + $0xe0] sm:$0xff] %v2329
    %2394 = vst [vmem:[#allocation8 + $0xe8] sm:$0xff] %v2330
    %2395 = vst [vmem:[#allocation8 + $0xf0] sm:$0xff] %v2331
    %2396 = vst [vmem:[#allocation8 + $0xf8] sm:$0xff] %v2332
    %2397 = vst [vmem:[#allocation8 + $0x100] sm:$0xff] %v2333
    %2398 = vst [vmem:[#allocation8 + $0x108] sm:$0xff] %v2334
    %2399 = vst [vmem:[#allocation8 + $0x110] sm:$0xff] %v2335
    %2400 = vst [vmem:[#allocation8 + $0x118] sm:$0xff] %v2336
    %2401 = vst [vmem:[#allocation8 + $0x120] sm:$0xff] %v2337
    %2402 = vst [vmem:[#allocation8 + $0x128] sm:$0xff] %v2338
    %2403 = vst [vmem:[#allocation8 + $0x130] sm:$0xff] %v2339
    %2404 = vst [vmem:[#allocation8 + $0x138] sm:$0xff] %v2340
    %2405 = vst [vmem:[#allocation8 + $0x140] sm:$0xff] %v2341
    %2406 = vst [vmem:[#allocation8 + $0x148] sm:$0xff] %v2342
    %2407 = vst [vmem:[#allocation8 + $0x150] sm:$0xff] %v2343
    %2408 = vst [vmem:[#allocation8 + $0x158] sm:$0xff] %v2344
    %2409 = vst [vmem:[#allocation8 + $0x160] sm:$0xff] %v2345
    %2410 = vst [vmem:[#allocation8 + $0x168] sm:$0xff] %v2346
    %2411 = vst [vmem:[#allocation8 + $0x170] sm:$0xff] %v2347
    %2412 = vst [vmem:[#allocation8 + $0x178] sm:$0xff] %v2348
    %2413 = vst [vmem:[#allocation8 + $0x180] sm:$0xff] %v2349
    %2414 = vst [vmem:[#allocation8 + $0x188] sm:$0xff] %v2350
    %2415 = vst [vmem:[#allocation8 + $0x190] sm:$0xff] %v2351
    %2416 = vst [vmem:[#allocation8 + $0x198] sm:$0xff] %v2352
    %2417 = vst [vmem:[#allocation8 + $0x1a0] sm:$0xff] %v2353
    %2418 = vst [vmem:[#allocation8 + $0x1a8] sm:$0xff] %v2354
    %2419 = vst [vmem:[#allocation8 + $0x1b0] sm:$0xff] %v2355
    %2420 = vst [vmem:[#allocation8 + $0x1b8] sm:$0xff] %v2356
    %2421 = vst [vmem:[#allocation8 + $0x1c0] sm:$0xff] %v2357
    %2422 = vst [vmem:[#allocation8 + $0x1c8] sm:$0xff] %v2358
    %2423 = vst [vmem:[#allocation8 + $0x1d0] sm:$0xff] %v2359
    %2424 = vst [vmem:[#allocation8 + $0x1d8] sm:$0xff] %v2360
    %2425 = vst [vmem:[#allocation8 + $0x1e0] sm:$0xff] %v2361
    %2426 = vst [vmem:[#allocation8 + $0x1e8] sm:$0xff] %v2362
    %2427 = vst [vmem:[#allocation8 + $0x1f0] sm:$0xff] %v2363
    %2428 = vst [vmem:[#allocation8 + $0x1f8] sm:$0xff] %v2364
    // Predicated region
    $region26: #{tpu_custom_call.1} parent=1 // pred_check
      _
    $region27: #{tpu_custom_call.1} parent=1 // pred_check_branch
      %2430 = sbr.rel (0) target = $region29
    $region28: #{tpu_custom_call.1} parent=1 // pred_region
      %s2432 = ssub.s32 8192, 8192
      %2433 = vsyncadd [#allocation4], %s2432
      %s2434 = sshll.u32 [#allocation8], 4
      %s2435 = int_to_ptr.vmem [resolvable:$true] %s2434
      %2440 = dma.vmem_to_hbm [thread:$0]  %s2435, 8192, %s3, [#allocation4], 256, 256, 16
    $region29: #{tpu_custom_call.1} parent=1 // pred_fallthru
      _
    // Predicated region
    $region30: #{tpu_custom_call.1} parent=1 // pred_check
      _
    $region31: #{tpu_custom_call.1} parent=1 // pred_check_branch
      %2442 = sbr.rel (0) target = $region33
    $region32: #{tpu_custom_call.1} parent=1 // pred_region
      %2443 = dma.done [#allocation4], 8192
    $region33: #{tpu_custom_call.1} parent=1 // pred_fallthru
      _
    %2444 = vsyncpa [#allocation3], 1
    %2445 = vsyncpa [#allocation6], 1
    %2446 = vsyncpa [#allocation4], 1

</llo_original>
